<compile_context>
chip_gen: v7x
topology: tpu7x:2x2x1
jax: 0.10.0
libtpu: 0.0.40
codegen_flags: <defaults>
</compile_context>

<pallas_src>
import functools

import jax
import jax.numpy as jnp
import numpy as np
from jax.experimental import pallas as pl
from jax.experimental.pallas import tpu as pltpu

DIM_X = 3
FILTER_SIZE = 128
LAYER_SIZE = 8             # total linear+relu blocks before the output layer
N_HIDDEN = LAYER_SIZE - 1  # number of (F -> F) hidden linear layers

_MiB = 1024 * 1024


def _round_up(x, m):
    return (x + m - 1) // m * m


def _tpu_generation():
    try:
        kind = jax.devices()[0].device_kind.lower()
    except Exception:
        return "unknown"
    if "v7" in kind or "7x" in kind:
        return "v7"
    if "v6" in kind:
        return "v6"
    if "v5e" in kind or "v5 lite" in kind or "v5litepod" in kind:
        return "v5e"
    return "unknown"


def default_config():
    """Generation-gated defaults (all choices are perf-only, never correctness)."""
    gen = _tpu_generation()
    new_gen = gen in ("v6", "v7")          # 256x256 MXU + bf16 VPU
    if gen == "v7":                        # 64 MiB physical VMEM, 2 TensorCores
        tile_rows, vmem = 2048, 48 * _MiB
    elif gen == "v6":                      # 128 MiB physical VMEM
        tile_rows, vmem = 4096, 96 * _MiB
    elif gen == "v5e":                     # 128 MiB physical, 16 MiB default scoped
        tile_rows, vmem = 8192, 96 * _MiB
    else:                                  # conservative: stay under default scoped VMEM
        tile_rows, vmem = 2048, None
    return dict(packed=new_gen, bf16_epilogue=new_gen, tile_rows=tile_rows,
                vmem_limit_bytes=vmem, two_cores=(gen == "v7"))


def _mlp_kernel(x_ref, w_in_ref, b_in_ref, w_hid_ref, b_hid_ref,
                w_out_ref, b_out_ref, o_ref, *, k_in, n_hidden):
    # ---- layer 0: [tr, k_in] x [k_in, F_eff] as a VPU outer product --------
    # K is 3 (or 6 when dual-stream packed); an MXU pass would be ~2% utilized,
    # so a handful of broadcast FMAs on the VPU is cheaper and leaves the MXU
    # free for the hidden chain.
    x = x_ref[...]                       # [tr, k_in]  f32
    w_in = w_in_ref[...]                 # [k_in, F_eff] f32
    h = x[:, 0:1] * w_in[0:1, :]
    for d in range(1, k_in):
        h = h + x[:, d:d + 1] * w_in[d:d + 1, :]
    # f32 bias + ReLU, then carry the activation in bf16 (MXU input dtype).
    h = jnp.maximum(h + b_in_ref[...], 0.0).astype(jnp.bfloat16)

    # ---- hidden layers: bf16 MXU matmuls, f32 accumulate -------------------
    # The bias/ReLU epilogue runs in the bias dtype: bf16 on v6e/v7x (packed
    # bf16 VPU, half the VALU issues), f32 on v5e. The result is always stored
    # back as bf16 so the inter-layer activation round-trip is half-width.
    ep = b_hid_ref.dtype
    for l in range(n_hidden):
        acc = jnp.dot(h, w_hid_ref[l], preferred_element_type=jnp.float32)
        h = jnp.maximum(acc.astype(ep) + b_hid_ref[l], 0.0).astype(jnp.bfloat16)

    # ---- output layer: [tr, F_eff] @ [F_eff, k_out] + bias, no activation --
    out = jnp.dot(h, w_out_ref[...],
                  preferred_element_type=jnp.float32) + b_out_ref[...]
    o_ref[...] = out.astype(o_ref.dtype)


def neural_prior_forward(x, params, *, tile_rows=None, packed=None,
                         bf16_epilogue=None, vmem_limit_bytes=None,
                         two_cores=None):
    """x: [B, N, dim_x] -> [B, N, dim_x] float32."""
    cfg = default_config()
    if tile_rows is None:
        tile_rows = cfg["tile_rows"]
    if packed is None:
        packed = cfg["packed"]
    if bf16_epilogue is None:
        bf16_epilogue = cfg["bf16_epilogue"]
    if vmem_limit_bytes is None:
        vmem_limit_bytes = cfg["vmem_limit_bytes"]
    if two_cores is None:
        two_cores = cfg["two_cores"]

    B, N, dim_x = x.shape
    M = B * N
    w_in, b_in, w_hid, b_hid, w_out, b_out = params
    F = w_in.shape[1]
    n_hidden = w_hid.shape[0]

    # ---- row tiling --------------------------------------------------------
    # In packed (dual-stream) mode each kernel row carries two points, so the
    # kernel-space row count is ~M/2.
    n_streams = 2 if packed else 1
    rows_min = _round_up(pl.cdiv(M, n_streams), 8)

    # Pick the step count: single-TC chips use as few (big) steps as possible;
    # v7x forces an even step count so both TensorCores stay balanced under
    # dimension_semantics=("parallel",).
    if two_cores and rows_min >= 16:
        n_steps = 2 * pl.cdiv(rows_min, 2 * tile_rows)
    else:
        n_steps = pl.cdiv(rows_min, tile_rows)
    tr = _round_up(pl.cdiv(rows_min, n_steps), 8)
    grid = n_steps
    rows = grid * tr                     # kernel-space rows (padded)
    m_pad = rows * n_streams             # total padded points

    x2d = x.reshape(M, dim_x).astype(jnp.float32)
    if m_pad != M:
        x2d = jnp.pad(x2d, ((0, m_pad - M), (0, 0)))

    ep_dtype = jnp.bfloat16 if bf16_epilogue else jnp.float32

    # ---- stationary operands (constant index maps -> DMA'd once) -----------
    if packed:
        # Two row streams side-by-side along lanes; block-diagonal weights.
        x_k = jnp.concatenate([x2d[:rows], x2d[rows:]], axis=1)      # [rows, 2*dim_x]
        zi = jnp.zeros_like(w_in)
        w_in_e = jnp.concatenate([jnp.concatenate([w_in, zi], 1),
                                  jnp.concatenate([zi, w_in], 1)], 0)    # [2*dim_x, 2F]
        zh = jnp.zeros_like(w_hid)
        w_hid_e = jnp.concatenate([jnp.concatenate([w_hid, zh], 2),
                                   jnp.concatenate([zh, w_hid], 2)], 1)  # [n_hid, 2F, 2F]
        zo = jnp.zeros_like(w_out)
        w_out_e = jnp.concatenate([jnp.concatenate([w_out, zo], 1),
                                   jnp.concatenate([zo, w_out], 1)], 0)  # [2F, 2*dim_x]
        b_in_e = jnp.concatenate([b_in, b_in])
        b_hid_e = jnp.concatenate([b_hid, b_hid], axis=-1)
        b_out_e = jnp.concatenate([b_out, b_out])
    else:
        x_k, w_in_e, w_hid_e, w_out_e = x2d, w_in, w_hid, w_out
        b_in_e, b_hid_e, b_out_e = b_in, b_hid, b_out

    F_eff = F * n_streams
    k_in = dim_x * n_streams
    k_out = dim_x * n_streams

    w_in_e = w_in_e.astype(jnp.float32)                              # VPU layer
    b_in_e = b_in_e.reshape(1, F_eff).astype(jnp.float32)
    w_hid_e = w_hid_e.astype(jnp.bfloat16)                           # MXU dtype
    b_hid_e = b_hid_e.reshape(n_hidden, 1, F_eff).astype(ep_dtype)
    w_out_e = w_out_e.astype(jnp.bfloat16)
    b_out_e = b_out_e.reshape(1, k_out).astype(jnp.float32)

    kernel = functools.partial(_mlp_kernel, k_in=k_in, n_hidden=n_hidden)

    flops = 2 * rows * (k_in * F_eff + n_hidden * F_eff * F_eff + F_eff * k_out)
    weight_bytes = (w_in_e.size * 4 + b_in_e.size * 4 +
                    w_hid_e.size * 2 + b_hid_e.size * (2 if bf16_epilogue else 4) +
                    w_out_e.size * 2 + b_out_e.size * 4)
    cost = pl.CostEstimate(flops=flops, transcendentals=0,
                           bytes_accessed=rows * (k_in + k_out) * 4 + weight_bytes)

    out_k = pl.pallas_call(
        kernel,
        out_shape=jax.ShapeDtypeStruct((rows, k_out), jnp.float32),
        grid_spec=pltpu.PrefetchScalarGridSpec(
            num_scalar_prefetch=0,
            grid=(grid,),
            in_specs=[
                pl.BlockSpec((tr, k_in), lambda i: (i, 0)),            # x tile
                # Constant index maps: DMA'd once, VMEM-resident across steps.
                pl.BlockSpec((k_in, F_eff), lambda i: (0, 0)),          # w_in
                pl.BlockSpec((1, F_eff), lambda i: (0, 0)),             # b_in
                pl.BlockSpec((n_hidden, F_eff, F_eff), lambda i: (0, 0, 0)),  # w_hid
                pl.BlockSpec((n_hidden, 1, F_eff), lambda i: (0, 0, 0)),      # b_hid
                pl.BlockSpec((F_eff, k_out), lambda i: (0, 0)),         # w_out
                pl.BlockSpec((1, k_out), lambda i: (0, 0)),             # b_out
            ],
            out_specs=pl.BlockSpec((tr, k_out), lambda i: (i, 0)),
        ),
        compiler_params=pltpu.CompilerParams(
            dimension_semantics=("parallel",),
            vmem_limit_bytes=vmem_limit_bytes),
        cost_estimate=cost,
    )(x_k, w_in_e, b_in_e, w_hid_e, b_hid_e, w_out_e, b_out_e)

    if packed:
        out2d = jnp.concatenate([out_k[:, :dim_x], out_k[:, dim_x:]], axis=0)
    else:
        out2d = out_k
    return out2d[:M].reshape(B, N, dim_x)


def init_params(key, dim_x=DIM_X, filter_size=FILTER_SIZE, n_hidden=N_HIDDEN):
    """Deterministic init mimicking torch.nn.Linear (uniform +-1/sqrt(fan_in)).
    Weights are stored [in_features, out_features]."""
    ks = jax.random.split(key, 6)

    def unif(k, shape, fan_in):
        bound = 1.0 / np.sqrt(fan_in)
        return jax.random.uniform(k, shape, jnp.float32, -bound, bound)

    w_in = unif(ks[0], (dim_x, filter_size), dim_x)
    b_in = unif(ks[1], (filter_size,), dim_x)
    w_hid = unif(ks[2], (n_hidden, filter_size, filter_size), filter_size)
    b_hid = unif(ks[3], (n_hidden, filter_size), filter_size)
    w_out = unif(ks[4], (filter_size, dim_x), filter_size)
    b_out = unif(ks[5], (dim_x,), filter_size)
    return w_in, b_in, w_hid, b_hid, w_out, b_out


def reference_forward(x, params, *, bf16_epilogue=False):
    """JAX reference mirroring the kernel's bf16-matmul / f32-accumulate numerics."""
    w_in, b_in, w_hid, b_hid, w_out, b_out = params
    B, N, dim_x = x.shape
    h = x.reshape(B * N, dim_x).astype(jnp.float32)
    h = jnp.maximum(h @ w_in.astype(jnp.float32) + b_in, 0.0).astype(jnp.bfloat16)
    for l in range(w_hid.shape[0]):
        acc = jnp.dot(h, w_hid[l].astype(jnp.bfloat16),
                      preferred_element_type=jnp.float32)
        if bf16_epilogue:
            h = jnp.maximum(acc.astype(jnp.bfloat16)
                            + b_hid[l].astype(jnp.bfloat16), 0.0)
        else:
            h = jnp.maximum(acc + b_hid[l], 0.0).astype(jnp.bfloat16)
    out = jnp.dot(h, w_out.astype(jnp.bfloat16),
                  preferred_element_type=jnp.float32) + b_out
    return out.reshape(B, N, dim_x)


if __name__ == "__main__":
    key = jax.random.PRNGKey(0)
    kx, kp = jax.random.split(key)

    B, N = 2, 128   # points: [B, N, 3]
    x = jax.random.normal(kx, (B, N, DIM_X), dtype=jnp.float32)
    params = init_params(kp)

    cfg = default_config()
    out = neural_prior_forward(x, params, **cfg)
    out = jax.block_until_ready(out)

    ref = reference_forward(x, params, bf16_epilogue=cfg["bf16_epilogue"])
    np.testing.assert_allclose(np.asarray(out), np.asarray(ref),
                               rtol=1e-3, atol=1e-3)
    assert out.shape == (B, N, DIM_X)
    print("KERNEL_OK")
</pallas_src>

<mosaic_0001>
module attributes {stable_mosaic.version = 11 : i64} {
  func.func @_mlp_kernel(%arg0: i32, %arg1: memref<256x3xf32, #tpu.memory_space<vmem>>, %arg2: memref<3x128xf32, #tpu.memory_space<vmem>>, %arg3: memref<1x128xf32, #tpu.memory_space<vmem>>, %arg4: memref<7x128x128xbf16, #tpu.memory_space<vmem>>, %arg5: memref<7x1x128xf32, #tpu.memory_space<vmem>>, %arg6: memref<128x3xbf16, #tpu.memory_space<vmem>>, %arg7: memref<1x3xf32, #tpu.memory_space<vmem>>, %arg8: memref<256x3xf32, #tpu.memory_space<vmem>>) attributes {dimension_semantics = [#tpu.dimension_semantics<parallel>], iteration_bounds = array<i64: 1>, scalar_prefetch = 0 : i64, scratch_operands = 0 : i64, tpu.core_type = #tpu.core_type<tc>, window_params = [{transform_indices = @transform_0, window_bounds = array<i64: 256, 3>}, {pipeline_mode = #tpu.pipeline_mode<synchronous>, transform_indices = @transform_1, window_bounds = array<i64: 3, 128>}, {pipeline_mode = #tpu.pipeline_mode<synchronous>, transform_indices = @transform_2, window_bounds = array<i64: 1, 128>}, {pipeline_mode = #tpu.pipeline_mode<synchronous>, transform_indices = @transform_3, window_bounds = array<i64: 7, 128, 128>}, {pipeline_mode = #tpu.pipeline_mode<synchronous>, transform_indices = @transform_4, window_bounds = array<i64: 7, 1, 128>}, {pipeline_mode = #tpu.pipeline_mode<synchronous>, transform_indices = @transform_5, window_bounds = array<i64: 128, 3>}, {pipeline_mode = #tpu.pipeline_mode<synchronous>, transform_indices = @transform_6, window_bounds = array<i64: 1, 3>}, {transform_indices = @transform_7, window_bounds = array<i64: 256, 3>}]} {
    %c0 = arith.constant 0 : index
    %c0_0 = arith.constant 0 : index
    %0 = vector.load %arg1[%c0, %c0_0] : memref<256x3xf32, #tpu.memory_space<vmem>>, vector<256x3xf32>
    %c0_1 = arith.constant 0 : index
    %c0_2 = arith.constant 0 : index
    %1 = vector.load %arg2[%c0_1, %c0_2] : memref<3x128xf32, #tpu.memory_space<vmem>>, vector<3x128xf32>
    %2 = vector.extract_strided_slice %0 {offsets = [0, 0], sizes = [256, 1], strides = [1, 1]} : vector<256x3xf32> to vector<256x1xf32>
    %3 = vector.extract_strided_slice %1 {offsets = [0, 0], sizes = [1, 128], strides = [1, 1]} : vector<3x128xf32> to vector<1x128xf32>
    %4 = vector.broadcast %2 : vector<256x1xf32> to vector<256x128xf32>
    %5 = vector.broadcast %3 : vector<1x128xf32> to vector<256x128xf32>
    %6 = arith.mulf %4, %5 : vector<256x128xf32>
    %7 = vector.extract_strided_slice %0 {offsets = [0, 1], sizes = [256, 1], strides = [1, 1]} : vector<256x3xf32> to vector<256x1xf32>
    %8 = vector.extract_strided_slice %1 {offsets = [1, 0], sizes = [1, 128], strides = [1, 1]} : vector<3x128xf32> to vector<1x128xf32>
    %9 = vector.broadcast %7 : vector<256x1xf32> to vector<256x128xf32>
    %10 = vector.broadcast %8 : vector<1x128xf32> to vector<256x128xf32>
    %11 = arith.mulf %9, %10 : vector<256x128xf32>
    %12 = arith.addf %6, %11 : vector<256x128xf32>
    %13 = vector.extract_strided_slice %0 {offsets = [0, 2], sizes = [256, 1], strides = [1, 1]} : vector<256x3xf32> to vector<256x1xf32>
    %14 = vector.extract_strided_slice %1 {offsets = [2, 0], sizes = [1, 128], strides = [1, 1]} : vector<3x128xf32> to vector<1x128xf32>
    %15 = vector.broadcast %13 : vector<256x1xf32> to vector<256x128xf32>
    %16 = vector.broadcast %14 : vector<1x128xf32> to vector<256x128xf32>
    %17 = arith.mulf %15, %16 : vector<256x128xf32>
    %18 = arith.addf %12, %17 : vector<256x128xf32>
    %c0_3 = arith.constant 0 : index
    %c0_4 = arith.constant 0 : index
    %19 = vector.load %arg3[%c0_3, %c0_4] : memref<1x128xf32, #tpu.memory_space<vmem>>, vector<1x128xf32>
    %20 = vector.broadcast %19 : vector<1x128xf32> to vector<256x128xf32>
    %21 = arith.addf %18, %20 : vector<256x128xf32>
    %cst = arith.constant 0.000000e+00 : f32
    %22 = vector.broadcast %cst : f32 to vector<256x128xf32>
    %23 = arith.maximumf %21, %22 : vector<256x128xf32>
    %24 = arith.truncf %23 : vector<256x128xf32> to vector<256x128xbf16>
    %c0_5 = arith.constant 0 : index
    %c0_6 = arith.constant 0 : index
    %c0_7 = arith.constant 0 : index
    %25 = vector.load %arg4[%c0_5, %c0_6, %c0_7] : memref<7x128x128xbf16, #tpu.memory_space<vmem>>, vector<1x128x128xbf16>
    %26 = vector.shape_cast %25 : vector<1x128x128xbf16> to vector<128x128xbf16>
    %cst_8 = arith.constant dense<0.000000e+00> : vector<256x128xf32>
    %27 = tpu.matmul %24, %26, %cst_8 {dimension_numbers = #tpu.dot_dimension_numbers<[1], [0], [0], [1], [0, 0, 1, 1], [], []>} : vector<256x128xbf16>, vector<128x128xbf16>, vector<256x128xf32> -> vector<256x128xf32>
    %c0_9 = arith.constant 0 : index
    %c0_10 = arith.constant 0 : index
    %c0_11 = arith.constant 0 : index
    %28 = vector.load %arg5[%c0_9, %c0_10, %c0_11] : memref<7x1x128xf32, #tpu.memory_space<vmem>>, vector<1x1x128xf32>
    %29 = vector.shape_cast %28 : vector<1x1x128xf32> to vector<1x128xf32>
    %30 = vector.broadcast %29 : vector<1x128xf32> to vector<256x128xf32>
    %31 = arith.addf %27, %30 : vector<256x128xf32>
    %cst_12 = arith.constant 0.000000e+00 : f32
    %32 = vector.broadcast %cst_12 : f32 to vector<256x128xf32>
    %33 = arith.maximumf %31, %32 : vector<256x128xf32>
    %34 = arith.truncf %33 : vector<256x128xf32> to vector<256x128xbf16>
    %c1 = arith.constant 1 : index
    %c0_13 = arith.constant 0 : index
    %c0_14 = arith.constant 0 : index
    %35 = vector.load %arg4[%c1, %c0_13, %c0_14] : memref<7x128x128xbf16, #tpu.memory_space<vmem>>, vector<1x128x128xbf16>
    %36 = vector.shape_cast %35 : vector<1x128x128xbf16> to vector<128x128xbf16>
    %cst_15 = arith.constant dense<0.000000e+00> : vector<256x128xf32>
    %37 = tpu.matmul %34, %36, %cst_15 {dimension_numbers = #tpu.dot_dimension_numbers<[1], [0], [0], [1], [0, 0, 1, 1], [], []>} : vector<256x128xbf16>, vector<128x128xbf16>, vector<256x128xf32> -> vector<256x128xf32>
    %c1_16 = arith.constant 1 : index
    %c0_17 = arith.constant 0 : index
    %c0_18 = arith.constant 0 : index
    %38 = vector.load %arg5[%c1_16, %c0_17, %c0_18] : memref<7x1x128xf32, #tpu.memory_space<vmem>>, vector<1x1x128xf32>
    %39 = vector.shape_cast %38 : vector<1x1x128xf32> to vector<1x128xf32>
    %40 = vector.broadcast %39 : vector<1x128xf32> to vector<256x128xf32>
    %41 = arith.addf %37, %40 : vector<256x128xf32>
    %cst_19 = arith.constant 0.000000e+00 : f32
    %42 = vector.broadcast %cst_19 : f32 to vector<256x128xf32>
    %43 = arith.maximumf %41, %42 : vector<256x128xf32>
    %44 = arith.truncf %43 : vector<256x128xf32> to vector<256x128xbf16>
    %c2 = arith.constant 2 : index
    %c0_20 = arith.constant 0 : index
    %c0_21 = arith.constant 0 : index
    %45 = vector.load %arg4[%c2, %c0_20, %c0_21] : memref<7x128x128xbf16, #tpu.memory_space<vmem>>, vector<1x128x128xbf16>
    %46 = vector.shape_cast %45 : vector<1x128x128xbf16> to vector<128x128xbf16>
    %cst_22 = arith.constant dense<0.000000e+00> : vector<256x128xf32>
    %47 = tpu.matmul %44, %46, %cst_22 {dimension_numbers = #tpu.dot_dimension_numbers<[1], [0], [0], [1], [0, 0, 1, 1], [], []>} : vector<256x128xbf16>, vector<128x128xbf16>, vector<256x128xf32> -> vector<256x128xf32>
    %c2_23 = arith.constant 2 : index
    %c0_24 = arith.constant 0 : index
    %c0_25 = arith.constant 0 : index
    %48 = vector.load %arg5[%c2_23, %c0_24, %c0_25] : memref<7x1x128xf32, #tpu.memory_space<vmem>>, vector<1x1x128xf32>
    %49 = vector.shape_cast %48 : vector<1x1x128xf32> to vector<1x128xf32>
    %50 = vector.broadcast %49 : vector<1x128xf32> to vector<256x128xf32>
    %51 = arith.addf %47, %50 : vector<256x128xf32>
    %cst_26 = arith.constant 0.000000e+00 : f32
    %52 = vector.broadcast %cst_26 : f32 to vector<256x128xf32>
    %53 = arith.maximumf %51, %52 : vector<256x128xf32>
    %54 = arith.truncf %53 : vector<256x128xf32> to vector<256x128xbf16>
    %c3 = arith.constant 3 : index
    %c0_27 = arith.constant 0 : index
    %c0_28 = arith.constant 0 : index
    %55 = vector.load %arg4[%c3, %c0_27, %c0_28] : memref<7x128x128xbf16, #tpu.memory_space<vmem>>, vector<1x128x128xbf16>
    %56 = vector.shape_cast %55 : vector<1x128x128xbf16> to vector<128x128xbf16>
    %cst_29 = arith.constant dense<0.000000e+00> : vector<256x128xf32>
    %57 = tpu.matmul %54, %56, %cst_29 {dimension_numbers = #tpu.dot_dimension_numbers<[1], [0], [0], [1], [0, 0, 1, 1], [], []>} : vector<256x128xbf16>, vector<128x128xbf16>, vector<256x128xf32> -> vector<256x128xf32>
    %c3_30 = arith.constant 3 : index
    %c0_31 = arith.constant 0 : index
    %c0_32 = arith.constant 0 : index
    %58 = vector.load %arg5[%c3_30, %c0_31, %c0_32] : memref<7x1x128xf32, #tpu.memory_space<vmem>>, vector<1x1x128xf32>
    %59 = vector.shape_cast %58 : vector<1x1x128xf32> to vector<1x128xf32>
    %60 = vector.broadcast %59 : vector<1x128xf32> to vector<256x128xf32>
    %61 = arith.addf %57, %60 : vector<256x128xf32>
    %cst_33 = arith.constant 0.000000e+00 : f32
    %62 = vector.broadcast %cst_33 : f32 to vector<256x128xf32>
    %63 = arith.maximumf %61, %62 : vector<256x128xf32>
    %64 = arith.truncf %63 : vector<256x128xf32> to vector<256x128xbf16>
    %c4 = arith.constant 4 : index
    %c0_34 = arith.constant 0 : index
    %c0_35 = arith.constant 0 : index
    %65 = vector.load %arg4[%c4, %c0_34, %c0_35] : memref<7x128x128xbf16, #tpu.memory_space<vmem>>, vector<1x128x128xbf16>
    %66 = vector.shape_cast %65 : vector<1x128x128xbf16> to vector<128x128xbf16>
    %cst_36 = arith.constant dense<0.000000e+00> : vector<256x128xf32>
    %67 = tpu.matmul %64, %66, %cst_36 {dimension_numbers = #tpu.dot_dimension_numbers<[1], [0], [0], [1], [0, 0, 1, 1], [], []>} : vector<256x128xbf16>, vector<128x128xbf16>, vector<256x128xf32> -> vector<256x128xf32>
    %c4_37 = arith.constant 4 : index
    %c0_38 = arith.constant 0 : index
    %c0_39 = arith.constant 0 : index
    %68 = vector.load %arg5[%c4_37, %c0_38, %c0_39] : memref<7x1x128xf32, #tpu.memory_space<vmem>>, vector<1x1x128xf32>
    %69 = vector.shape_cast %68 : vector<1x1x128xf32> to vector<1x128xf32>
    %70 = vector.broadcast %69 : vector<1x128xf32> to vector<256x128xf32>
    %71 = arith.addf %67, %70 : vector<256x128xf32>
    %cst_40 = arith.constant 0.000000e+00 : f32
    %72 = vector.broadcast %cst_40 : f32 to vector<256x128xf32>
    %73 = arith.maximumf %71, %72 : vector<256x128xf32>
    %74 = arith.truncf %73 : vector<256x128xf32> to vector<256x128xbf16>
    %c5 = arith.constant 5 : index
    %c0_41 = arith.constant 0 : index
    %c0_42 = arith.constant 0 : index
    %75 = vector.load %arg4[%c5, %c0_41, %c0_42] : memref<7x128x128xbf16, #tpu.memory_space<vmem>>, vector<1x128x128xbf16>
    %76 = vector.shape_cast %75 : vector<1x128x128xbf16> to vector<128x128xbf16>
    %cst_43 = arith.constant dense<0.000000e+00> : vector<256x128xf32>
    %77 = tpu.matmul %74, %76, %cst_43 {dimension_numbers = #tpu.dot_dimension_numbers<[1], [0], [0], [1], [0, 0, 1, 1], [], []>} : vector<256x128xbf16>, vector<128x128xbf16>, vector<256x128xf32> -> vector<256x128xf32>
    %c5_44 = arith.constant 5 : index
    %c0_45 = arith.constant 0 : index
    %c0_46 = arith.constant 0 : index
    %78 = vector.load %arg5[%c5_44, %c0_45, %c0_46] : memref<7x1x128xf32, #tpu.memory_space<vmem>>, vector<1x1x128xf32>
    %79 = vector.shape_cast %78 : vector<1x1x128xf32> to vector<1x128xf32>
    %80 = vector.broadcast %79 : vector<1x128xf32> to vector<256x128xf32>
    %81 = arith.addf %77, %80 : vector<256x128xf32>
    %cst_47 = arith.constant 0.000000e+00 : f32
    %82 = vector.broadcast %cst_47 : f32 to vector<256x128xf32>
    %83 = arith.maximumf %81, %82 : vector<256x128xf32>
    %84 = arith.truncf %83 : vector<256x128xf32> to vector<256x128xbf16>
    %c6 = arith.constant 6 : index
    %c0_48 = arith.constant 0 : index
    %c0_49 = arith.constant 0 : index
    %85 = vector.load %arg4[%c6, %c0_48, %c0_49] : memref<7x128x128xbf16, #tpu.memory_space<vmem>>, vector<1x128x128xbf16>
    %86 = vector.shape_cast %85 : vector<1x128x128xbf16> to vector<128x128xbf16>
    %cst_50 = arith.constant dense<0.000000e+00> : vector<256x128xf32>
    %87 = tpu.matmul %84, %86, %cst_50 {dimension_numbers = #tpu.dot_dimension_numbers<[1], [0], [0], [1], [0, 0, 1, 1], [], []>} : vector<256x128xbf16>, vector<128x128xbf16>, vector<256x128xf32> -> vector<256x128xf32>
    %c6_51 = arith.constant 6 : index
    %c0_52 = arith.constant 0 : index
    %c0_53 = arith.constant 0 : index
    %88 = vector.load %arg5[%c6_51, %c0_52, %c0_53] : memref<7x1x128xf32, #tpu.memory_space<vmem>>, vector<1x1x128xf32>
    %89 = vector.shape_cast %88 : vector<1x1x128xf32> to vector<1x128xf32>
    %90 = vector.broadcast %89 : vector<1x128xf32> to vector<256x128xf32>
    %91 = arith.addf %87, %90 : vector<256x128xf32>
    %cst_54 = arith.constant 0.000000e+00 : f32
    %92 = vector.broadcast %cst_54 : f32 to vector<256x128xf32>
    %93 = arith.maximumf %91, %92 : vector<256x128xf32>
    %94 = arith.truncf %93 : vector<256x128xf32> to vector<256x128xbf16>
    %c0_55 = arith.constant 0 : index
    %c0_56 = arith.constant 0 : index
    %95 = vector.load %arg6[%c0_55, %c0_56] : memref<128x3xbf16, #tpu.memory_space<vmem>>, vector<128x3xbf16>
    %cst_57 = arith.constant dense<0.000000e+00> : vector<256x3xf32>
    %96 = tpu.matmul %94, %95, %cst_57 {dimension_numbers = #tpu.dot_dimension_numbers<[1], [0], [0], [1], [0, 0, 1, 1], [], []>} : vector<256x128xbf16>, vector<128x3xbf16>, vector<256x3xf32> -> vector<256x3xf32>
    %c0_58 = arith.constant 0 : index
    %c0_59 = arith.constant 0 : index
    %97 = vector.load %arg7[%c0_58, %c0_59] : memref<1x3xf32, #tpu.memory_space<vmem>>, vector<1x3xf32>
    %98 = vector.broadcast %97 : vector<1x3xf32> to vector<256x3xf32>
    %99 = arith.addf %96, %98 : vector<256x3xf32>
    %c0_60 = arith.constant 0 : index
    %c0_61 = arith.constant 0 : index
    %100 = vector.load %arg8[%c0_60, %c0_61] : memref<256x3xf32, #tpu.memory_space<vmem>>, vector<256x3xf32>
    tpu.vector_store %arg8[%c0_60, %c0_61], %99 {strides = array<i32>} : memref<256x3xf32, #tpu.memory_space<vmem>>, vector<256x3xf32>,
    return
  }
  func.func @transform_0(%arg0: i32) -> (i32, i32) {
    %c0_i32 = arith.constant 0 : i32
    %c0_i32_0 = arith.constant 0 : i32
    return %arg0, %c0_i32 : i32, i32
  }
  func.func @transform_1(%arg0: i32) -> (i32, i32) {
    %c0_i32 = arith.constant 0 : i32
    %c0_i32_0 = arith.constant 0 : i32
    %c0_i32_1 = arith.constant 0 : i32
    return %c0_i32, %c0_i32_0 : i32, i32
  }
  func.func @transform_2(%arg0: i32) -> (i32, i32) {
    %c0_i32 = arith.constant 0 : i32
    %c0_i32_0 = arith.constant 0 : i32
    %c0_i32_1 = arith.constant 0 : i32
    return %c0_i32, %c0_i32_0 : i32, i32
  }
  func.func @transform_3(%arg0: i32) -> (i32, i32, i32) {
    %c0_i32 = arith.constant 0 : i32
    %c0_i32_0 = arith.constant 0 : i32
    %c0_i32_1 = arith.constant 0 : i32
    %c0_i32_2 = arith.constant 0 : i32
    return %c0_i32, %c0_i32_0, %c0_i32_1 : i32, i32, i32
  }
  func.func @transform_4(%arg0: i32) -> (i32, i32, i32) {
    %c0_i32 = arith.constant 0 : i32
    %c0_i32_0 = arith.constant 0 : i32
    %c0_i32_1 = arith.constant 0 : i32
    %c0_i32_2 = arith.constant 0 : i32
    return %c0_i32, %c0_i32_0, %c0_i32_1 : i32, i32, i32
  }
  func.func @transform_5(%arg0: i32) -> (i32, i32) {
    %c0_i32 = arith.constant 0 : i32
    %c0_i32_0 = arith.constant 0 : i32
    %c0_i32_1 = arith.constant 0 : i32
    return %c0_i32, %c0_i32_0 : i32, i32
  }
  func.func @transform_6(%arg0: i32) -> (i32, i32) {
    %c0_i32 = arith.constant 0 : i32
    %c0_i32_0 = arith.constant 0 : i32
    %c0_i32_1 = arith.constant 0 : i32
    return %c0_i32, %c0_i32_0 : i32, i32
  }
  func.func @transform_7(%arg0: i32) -> (i32, i32) {
    %c0_i32 = arith.constant 0 : i32
    %c0_i32_0 = arith.constant 0 : i32
    return %arg0, %c0_i32 : i32, i32
  }
}

</mosaic_0001>

<llo_original>
// kernel: tpu_custom_call.1
$region0: #{tpu_custom_call.1}
  #allocation0 [shape = 'u32[]', space=smem, size = 0x4, offset = 0x4, fixed_abs, tag = 'smem constant byte address 0x4 - core index']
  #allocation1 [shape = 'u32[144,128]{1,0:T(1,128)}', space=vmem, size = 0x12000, scoped, tag = 'internal scratch']
  %s0 = inlined_call_operand.vmem [shape: f32[256,3], index: 0, kind: input, shape index: {}]
  %s1 = inlined_call_operand.vmem [shape: f32[3,128], index: 1, kind: input, shape index: {}]
  %s2 = inlined_call_operand.vmem [shape: f32[1,128], index: 2, kind: input, shape index: {}]
  %s3 = inlined_call_operand.hbm [shape: bf16[7,128,128], index: 3, kind: input, shape index: {}]
  %s4 = inlined_call_operand.vmem [shape: f32[7,1,128], index: 4, kind: input, shape index: {}]
  %s5 = inlined_call_operand.vmem [shape: bf16[128,3], index: 5, kind: input, shape index: {}]
  %s6 = inlined_call_operand.vmem [shape: f32[1,3], index: 6, kind: input, shape index: {}]
  %s7 = inlined_call_operand.vmem [shape: f32[256,3], index: 7, kind: output, shape index: {}]
  %s8 = sld [smem:[#allocation0]]
  $region42: #{tpu_custom_call.1} parent=0
    _
  %s10 = ssub.s32 1, %s8
  %s11 = scalar_select 0, %s10, %s8
  $region1: #{tpu_custom_call.1} parent=0
    #allocation2 [shape = 'u8[229376]{0}', space=vmem, size = 0x38000, scoped, tag = 'input window, operand 3, single buffered']
    #allocation3 [shape = 's32[1]{0}', space=sflag, size = 0x4, scoped, tag = 'scoped memory for tpu_custom_call.1']
    %12 = vsyncpa [#allocation3], 0
    // Predicated region
    $region2: #{tpu_custom_call.1} parent=1 // pred_check
      _
    $region3: #{tpu_custom_call.1} parent=1 // pred_check_branch
      %14 = sbr.rel (0) target = $region5
    $region4: #{tpu_custom_call.1} parent=1 // pred_region
      _
    $region5: #{tpu_custom_call.1} parent=1 // pred_fallthru
      _
    // Predicated region
    $region6: #{tpu_custom_call.1} parent=1 // pred_check
      _
    $region7: #{tpu_custom_call.1} parent=1 // pred_check_branch
      %16 = sbr.rel (0) target = $region9
    $region8: #{tpu_custom_call.1} parent=1 // pred_region
      _
    $region9: #{tpu_custom_call.1} parent=1 // pred_fallthru
      _
    // Predicated region
    $region10: #{tpu_custom_call.1} parent=1 // pred_check
      _
    $region11: #{tpu_custom_call.1} parent=1 // pred_check_branch
      %18 = sbr.rel (0) target = $region13
    $region12: #{tpu_custom_call.1} parent=1 // pred_region
      _
    $region13: #{tpu_custom_call.1} parent=1 // pred_fallthru
      _
    // Predicated region
    $region14: #{tpu_custom_call.1} parent=1 // pred_check
      _
    $region15: #{tpu_custom_call.1} parent=1 // pred_check_branch
      %20 = sbr.rel (0) target = $region17
    $region16: #{tpu_custom_call.1} parent=1 // pred_region
      %s22 = ssub.s32 7168, 7168
      %23 = vsyncadd [#allocation3], %s22
      %s24 = sshll.u32 [#allocation2], 4
      %s25 = int_to_ptr.vmem [resolvable:$true] %s24
      %30 = dma.hbm_to_vmem [thread:$0]  %s3, 7168, %s25, [#allocation3], 64, 64, 4
    $region17: #{tpu_custom_call.1} parent=1 // pred_fallthru
      _
    // Predicated region
    $region18: #{tpu_custom_call.1} parent=1 // pred_check
      _
    $region19: #{tpu_custom_call.1} parent=1 // pred_check_branch
      %32 = sbr.rel (0) target = $region21
    $region20: #{tpu_custom_call.1} parent=1 // pred_region
      _
    $region21: #{tpu_custom_call.1} parent=1 // pred_fallthru
      _
    // Predicated region
    $region22: #{tpu_custom_call.1} parent=1 // pred_check
      _
    $region23: #{tpu_custom_call.1} parent=1 // pred_check_branch
      %34 = sbr.rel (0) target = $region25
    $region24: #{tpu_custom_call.1} parent=1 // pred_region
      _
    $region25: #{tpu_custom_call.1} parent=1 // pred_fallthru
      _
    // Predicated region
    $region26: #{tpu_custom_call.1} parent=1 // pred_check
      _
    $region27: #{tpu_custom_call.1} parent=1 // pred_check_branch
      %36 = sbr.rel (0) target = $region29
    $region28: #{tpu_custom_call.1} parent=1 // pred_region
      _
    $region29: #{tpu_custom_call.1} parent=1 // pred_fallthru
      _
    // Predicated region
    $region30: #{tpu_custom_call.1} parent=1 // pred_check
      _
    $region31: #{tpu_custom_call.1} parent=1 // pred_check_branch
      %38 = sbr.rel (0) target = $region33
    $region32: #{tpu_custom_call.1} parent=1 // pred_region
      %39 = dma.done [#allocation3], 7168
    $region33: #{tpu_custom_call.1} parent=1 // pred_fallthru
      _
    %v41 = vld [vmem:[%s0] sm:$0xff]
    %v42 = vld [vmem:[%s0 + $0x8] sm:$0xff]
    %v43 = vld [vmem:[%s0 + $0x10] sm:$0xff]
    %v44 = vld [vmem:[%s0 + $0x18] sm:$0xff]
    %v45 = vld [vmem:[%s0 + $0x20] sm:$0xff]
    %v46 = vld [vmem:[%s0 + $0x28] sm:$0xff]
    %v47 = vld [vmem:[%s0 + $0x30] sm:$0xff]
    %v48 = vld [vmem:[%s0 + $0x38] sm:$0xff]
    %v49 = vld [vmem:[%s0 + $0x40] sm:$0xff]
    %v50 = vld [vmem:[%s0 + $0x48] sm:$0xff]
    %v51 = vld [vmem:[%s0 + $0x50] sm:$0xff]
    %v52 = vld [vmem:[%s0 + $0x58] sm:$0xff]
    %v53 = vld [vmem:[%s0 + $0x60] sm:$0xff]
    %v54 = vld [vmem:[%s0 + $0x68] sm:$0xff]
    %v55 = vld [vmem:[%s0 + $0x70] sm:$0xff]
    %v56 = vld [vmem:[%s0 + $0x78] sm:$0xff]
    %v57 = vld [vmem:[%s0 + $0x80] sm:$0xff]
    %v58 = vld [vmem:[%s0 + $0x88] sm:$0xff]
    %v59 = vld [vmem:[%s0 + $0x90] sm:$0xff]
    %v60 = vld [vmem:[%s0 + $0x98] sm:$0xff]
    %v61 = vld [vmem:[%s0 + $0xa0] sm:$0xff]
    %v62 = vld [vmem:[%s0 + $0xa8] sm:$0xff]
    %v63 = vld [vmem:[%s0 + $0xb0] sm:$0xff]
    %v64 = vld [vmem:[%s0 + $0xb8] sm:$0xff]
    %v65 = vld [vmem:[%s0 + $0xc0] sm:$0xff]
    %v66 = vld [vmem:[%s0 + $0xc8] sm:$0xff]
    %v67 = vld [vmem:[%s0 + $0xd0] sm:$0xff]
    %v68 = vld [vmem:[%s0 + $0xd8] sm:$0xff]
    %v69 = vld [vmem:[%s0 + $0xe0] sm:$0xff]
    %v70 = vld [vmem:[%s0 + $0xe8] sm:$0xff]
    %v71 = vld [vmem:[%s0 + $0xf0] sm:$0xff]
    %v72 = vld [vmem:[%s0 + $0xf8] sm:$0xff]
    %v73 = vld [vmem:[%s1] sm:$0x7]
    %75 = vset.pattern.permute.xlu0 0
    %76 = vperm.xlu0 %75, %v41
    %v77 = vpop.permute.xlu0 %76
    %80 = vset.pattern.permute.xlu0 0
    %81 = vperm.xlu0 %80, %v42
    %v82 = vpop.permute.xlu0 %81
    %85 = vset.pattern.permute.xlu0 0
    %86 = vperm.xlu0 %85, %v43
    %v87 = vpop.permute.xlu0 %86
    %90 = vset.pattern.permute.xlu0 0
    %91 = vperm.xlu0 %90, %v44
    %v92 = vpop.permute.xlu0 %91
    %95 = vset.pattern.permute.xlu0 0
    %96 = vperm.xlu0 %95, %v45
    %v97 = vpop.permute.xlu0 %96
    %100 = vset.pattern.permute.xlu0 0
    %101 = vperm.xlu0 %100, %v46
    %v102 = vpop.permute.xlu0 %101
    %105 = vset.pattern.permute.xlu0 0
    %106 = vperm.xlu0 %105, %v47
    %v107 = vpop.permute.xlu0 %106
    %110 = vset.pattern.permute.xlu0 0
    %111 = vperm.xlu0 %110, %v48
    %v112 = vpop.permute.xlu0 %111
    %115 = vset.pattern.permute.xlu0 0
    %116 = vperm.xlu0 %115, %v49
    %v117 = vpop.permute.xlu0 %116
    %120 = vset.pattern.permute.xlu0 0
    %121 = vperm.xlu0 %120, %v50
    %v122 = vpop.permute.xlu0 %121
    %125 = vset.pattern.permute.xlu0 0
    %126 = vperm.xlu0 %125, %v51
    %v127 = vpop.permute.xlu0 %126
    %130 = vset.pattern.permute.xlu0 0
    %131 = vperm.xlu0 %130, %v52
    %v132 = vpop.permute.xlu0 %131
    %135 = vset.pattern.permute.xlu0 0
    %136 = vperm.xlu0 %135, %v53
    %v137 = vpop.permute.xlu0 %136
    %140 = vset.pattern.permute.xlu0 0
    %141 = vperm.xlu0 %140, %v54
    %v142 = vpop.permute.xlu0 %141
    %145 = vset.pattern.permute.xlu0 0
    %146 = vperm.xlu0 %145, %v55
    %v147 = vpop.permute.xlu0 %146
    %150 = vset.pattern.permute.xlu0 0
    %151 = vperm.xlu0 %150, %v56
    %v152 = vpop.permute.xlu0 %151
    %155 = vset.pattern.permute.xlu0 0
    %156 = vperm.xlu0 %155, %v57
    %v157 = vpop.permute.xlu0 %156
    %160 = vset.pattern.permute.xlu0 0
    %161 = vperm.xlu0 %160, %v58
    %v162 = vpop.permute.xlu0 %161
    %165 = vset.pattern.permute.xlu0 0
    %166 = vperm.xlu0 %165, %v59
    %v167 = vpop.permute.xlu0 %166
    %170 = vset.pattern.permute.xlu0 0
    %171 = vperm.xlu0 %170, %v60
    %v172 = vpop.permute.xlu0 %171
    %175 = vset.pattern.permute.xlu0 0
    %176 = vperm.xlu0 %175, %v61
    %v177 = vpop.permute.xlu0 %176
    %180 = vset.pattern.permute.xlu0 0
    %181 = vperm.xlu0 %180, %v62
    %v182 = vpop.permute.xlu0 %181
    %185 = vset.pattern.permute.xlu0 0
    %186 = vperm.xlu0 %185, %v63
    %v187 = vpop.permute.xlu0 %186
    %190 = vset.pattern.permute.xlu0 0
    %191 = vperm.xlu0 %190, %v64
    %v192 = vpop.permute.xlu0 %191
    %195 = vset.pattern.permute.xlu0 0
    %196 = vperm.xlu0 %195, %v65
    %v197 = vpop.permute.xlu0 %196
    %200 = vset.pattern.permute.xlu0 0
    %201 = vperm.xlu0 %200, %v66
    %v202 = vpop.permute.xlu0 %201
    %205 = vset.pattern.permute.xlu0 0
    %206 = vperm.xlu0 %205, %v67
    %v207 = vpop.permute.xlu0 %206
    %210 = vset.pattern.permute.xlu0 0
    %211 = vperm.xlu0 %210, %v68
    %v212 = vpop.permute.xlu0 %211
    %215 = vset.pattern.permute.xlu0 0
    %216 = vperm.xlu0 %215, %v69
    %v217 = vpop.permute.xlu0 %216
    %220 = vset.pattern.permute.xlu0 0
    %221 = vperm.xlu0 %220, %v70
    %v222 = vpop.permute.xlu0 %221
    %225 = vset.pattern.permute.xlu0 0
    %226 = vperm.xlu0 %225, %v71
    %v227 = vpop.permute.xlu0 %226
    %230 = vset.pattern.permute.xlu0 0
    %231 = vperm.xlu0 %230, %v72
    %v232 = vpop.permute.xlu0 %231
    %v234 = vlaneseq
    %v235 = vshrl.u32 %v234, 7
    %v236 = vsub.s32 0, %v235
    %v237 = vrot.slane %v73, %v236
    %v238 = vmul.f32 %v77, %v237
    %v239 = vmul.f32 %v82, %v237
    %v240 = vmul.f32 %v87, %v237
    %v241 = vmul.f32 %v92, %v237
    %v242 = vmul.f32 %v97, %v237
    %v243 = vmul.f32 %v102, %v237
    %v244 = vmul.f32 %v107, %v237
    %v245 = vmul.f32 %v112, %v237
    %v246 = vmul.f32 %v117, %v237
    %v247 = vmul.f32 %v122, %v237
    %v248 = vmul.f32 %v127, %v237
    %v249 = vmul.f32 %v132, %v237
    %v250 = vmul.f32 %v137, %v237
    %v251 = vmul.f32 %v142, %v237
    %v252 = vmul.f32 %v147, %v237
    %v253 = vmul.f32 %v152, %v237
    %v254 = vmul.f32 %v157, %v237
    %v255 = vmul.f32 %v162, %v237
    %v256 = vmul.f32 %v167, %v237
    %v257 = vmul.f32 %v172, %v237
    %v258 = vmul.f32 %v177, %v237
    %v259 = vmul.f32 %v182, %v237
    %v260 = vmul.f32 %v187, %v237
    %v261 = vmul.f32 %v192, %v237
    %v262 = vmul.f32 %v197, %v237
    %v263 = vmul.f32 %v202, %v237
    %v264 = vmul.f32 %v207, %v237
    %v265 = vmul.f32 %v212, %v237
    %v266 = vmul.f32 %v217, %v237
    %v267 = vmul.f32 %v222, %v237
    %v268 = vmul.f32 %v227, %v237
    %v269 = vmul.f32 %v232, %v237
    %270 = vset.pattern.permute.xlu0 1
    %271 = vperm.xlu0 %270, %v41
    %v272 = vpop.permute.xlu0 %271
    %274 = vset.pattern.permute.xlu0 1
    %275 = vperm.xlu0 %274, %v42
    %v276 = vpop.permute.xlu0 %275
    %278 = vset.pattern.permute.xlu0 1
    %279 = vperm.xlu0 %278, %v43
    %v280 = vpop.permute.xlu0 %279
    %282 = vset.pattern.permute.xlu0 1
    %283 = vperm.xlu0 %282, %v44
    %v284 = vpop.permute.xlu0 %283
    %286 = vset.pattern.permute.xlu0 1
    %287 = vperm.xlu0 %286, %v45
    %v288 = vpop.permute.xlu0 %287
    %290 = vset.pattern.permute.xlu0 1
    %291 = vperm.xlu0 %290, %v46
    %v292 = vpop.permute.xlu0 %291
    %294 = vset.pattern.permute.xlu0 1
    %295 = vperm.xlu0 %294, %v47
    %v296 = vpop.permute.xlu0 %295
    %298 = vset.pattern.permute.xlu0 1
    %299 = vperm.xlu0 %298, %v48
    %v300 = vpop.permute.xlu0 %299
    %302 = vset.pattern.permute.xlu0 1
    %303 = vperm.xlu0 %302, %v49
    %v304 = vpop.permute.xlu0 %303
    %306 = vset.pattern.permute.xlu0 1
    %307 = vperm.xlu0 %306, %v50
    %v308 = vpop.permute.xlu0 %307
    %310 = vset.pattern.permute.xlu0 1
    %311 = vperm.xlu0 %310, %v51
    %v312 = vpop.permute.xlu0 %311
    %314 = vset.pattern.permute.xlu0 1
    %315 = vperm.xlu0 %314, %v52
    %v316 = vpop.permute.xlu0 %315
    %318 = vset.pattern.permute.xlu0 1
    %319 = vperm.xlu0 %318, %v53
    %v320 = vpop.permute.xlu0 %319
    %322 = vset.pattern.permute.xlu0 1
    %323 = vperm.xlu0 %322, %v54
    %v324 = vpop.permute.xlu0 %323
    %326 = vset.pattern.permute.xlu0 1
    %327 = vperm.xlu0 %326, %v55
    %v328 = vpop.permute.xlu0 %327
    %330 = vset.pattern.permute.xlu0 1
    %331 = vperm.xlu0 %330, %v56
    %v332 = vpop.permute.xlu0 %331
    %334 = vset.pattern.permute.xlu0 1
    %335 = vperm.xlu0 %334, %v57
    %v336 = vpop.permute.xlu0 %335
    %338 = vset.pattern.permute.xlu0 1
    %339 = vperm.xlu0 %338, %v58
    %v340 = vpop.permute.xlu0 %339
    %342 = vset.pattern.permute.xlu0 1
    %343 = vperm.xlu0 %342, %v59
    %v344 = vpop.permute.xlu0 %343
    %346 = vset.pattern.permute.xlu0 1
    %347 = vperm.xlu0 %346, %v60
    %v348 = vpop.permute.xlu0 %347
    %350 = vset.pattern.permute.xlu0 1
    %351 = vperm.xlu0 %350, %v61
    %v352 = vpop.permute.xlu0 %351
    %354 = vset.pattern.permute.xlu0 1
    %355 = vperm.xlu0 %354, %v62
    %v356 = vpop.permute.xlu0 %355
    %358 = vset.pattern.permute.xlu0 1
    %359 = vperm.xlu0 %358, %v63
    %v360 = vpop.permute.xlu0 %359
    %362 = vset.pattern.permute.xlu0 1
    %363 = vperm.xlu0 %362, %v64
    %v364 = vpop.permute.xlu0 %363
    %366 = vset.pattern.permute.xlu0 1
    %367 = vperm.xlu0 %366, %v65
    %v368 = vpop.permute.xlu0 %367
    %370 = vset.pattern.permute.xlu0 1
    %371 = vperm.xlu0 %370, %v66
    %v372 = vpop.permute.xlu0 %371
    %374 = vset.pattern.permute.xlu0 1
    %375 = vperm.xlu0 %374, %v67
    %v376 = vpop.permute.xlu0 %375
    %378 = vset.pattern.permute.xlu0 1
    %379 = vperm.xlu0 %378, %v68
    %v380 = vpop.permute.xlu0 %379
    %382 = vset.pattern.permute.xlu0 1
    %383 = vperm.xlu0 %382, %v69
    %v384 = vpop.permute.xlu0 %383
    %386 = vset.pattern.permute.xlu0 1
    %387 = vperm.xlu0 %386, %v70
    %v388 = vpop.permute.xlu0 %387
    %390 = vset.pattern.permute.xlu0 1
    %391 = vperm.xlu0 %390, %v71
    %v392 = vpop.permute.xlu0 %391
    %394 = vset.pattern.permute.xlu0 1
    %395 = vperm.xlu0 %394, %v72
    %v396 = vpop.permute.xlu0 %395
    %v398 = vlaneseq
    %v399 = vshrl.u32 %v398, 7
    %v400 = vsub.s32 1, %v399
    %v401 = vrot.slane %v73, %v400
    %v402 = vmul.f32 %v272, %v401
    %v403 = vmul.f32 %v276, %v401
    %v404 = vmul.f32 %v280, %v401
    %v405 = vmul.f32 %v284, %v401
    %v406 = vmul.f32 %v288, %v401
    %v407 = vmul.f32 %v292, %v401
    %v408 = vmul.f32 %v296, %v401
    %v409 = vmul.f32 %v300, %v401
    %v410 = vmul.f32 %v304, %v401
    %v411 = vmul.f32 %v308, %v401
    %v412 = vmul.f32 %v312, %v401
    %v413 = vmul.f32 %v316, %v401
    %v414 = vmul.f32 %v320, %v401
    %v415 = vmul.f32 %v324, %v401
    %v416 = vmul.f32 %v328, %v401
    %v417 = vmul.f32 %v332, %v401
    %v418 = vmul.f32 %v336, %v401
    %v419 = vmul.f32 %v340, %v401
    %v420 = vmul.f32 %v344, %v401
    %v421 = vmul.f32 %v348, %v401
    %v422 = vmul.f32 %v352, %v401
    %v423 = vmul.f32 %v356, %v401
    %v424 = vmul.f32 %v360, %v401
    %v425 = vmul.f32 %v364, %v401
    %v426 = vmul.f32 %v368, %v401
    %v427 = vmul.f32 %v372, %v401
    %v428 = vmul.f32 %v376, %v401
    %v429 = vmul.f32 %v380, %v401
    %v430 = vmul.f32 %v384, %v401
    %v431 = vmul.f32 %v388, %v401
    %v432 = vmul.f32 %v392, %v401
    %v433 = vmul.f32 %v396, %v401
    %v434 = vadd.f32 %v238, %v402
    %v435 = vadd.f32 %v239, %v403
    %v436 = vadd.f32 %v240, %v404
    %v437 = vadd.f32 %v241, %v405
    %v438 = vadd.f32 %v242, %v406
    %v439 = vadd.f32 %v243, %v407
    %v440 = vadd.f32 %v244, %v408
    %v441 = vadd.f32 %v245, %v409
    %v442 = vadd.f32 %v246, %v410
    %v443 = vadd.f32 %v247, %v411
    %v444 = vadd.f32 %v248, %v412
    %v445 = vadd.f32 %v249, %v413
    %v446 = vadd.f32 %v250, %v414
    %v447 = vadd.f32 %v251, %v415
    %v448 = vadd.f32 %v252, %v416
    %v449 = vadd.f32 %v253, %v417
    %v450 = vadd.f32 %v254, %v418
    %v451 = vadd.f32 %v255, %v419
    %v452 = vadd.f32 %v256, %v420
    %v453 = vadd.f32 %v257, %v421
    %v454 = vadd.f32 %v258, %v422
    %v455 = vadd.f32 %v259, %v423
    %v456 = vadd.f32 %v260, %v424
    %v457 = vadd.f32 %v261, %v425
    %v458 = vadd.f32 %v262, %v426
    %v459 = vadd.f32 %v263, %v427
    %v460 = vadd.f32 %v264, %v428
    %v461 = vadd.f32 %v265, %v429
    %v462 = vadd.f32 %v266, %v430
    %v463 = vadd.f32 %v267, %v431
    %v464 = vadd.f32 %v268, %v432
    %v465 = vadd.f32 %v269, %v433
    %466 = vset.pattern.permute.xlu0 2
    %467 = vperm.xlu0 %466, %v41
    %v468 = vpop.permute.xlu0 %467
    %470 = vset.pattern.permute.xlu0 2
    %471 = vperm.xlu0 %470, %v42
    %v472 = vpop.permute.xlu0 %471
    %474 = vset.pattern.permute.xlu0 2
    %475 = vperm.xlu0 %474, %v43
    %v476 = vpop.permute.xlu0 %475
    %478 = vset.pattern.permute.xlu0 2
    %479 = vperm.xlu0 %478, %v44
    %v480 = vpop.permute.xlu0 %479
    %482 = vset.pattern.permute.xlu0 2
    %483 = vperm.xlu0 %482, %v45
    %v484 = vpop.permute.xlu0 %483
    %486 = vset.pattern.permute.xlu0 2
    %487 = vperm.xlu0 %486, %v46
    %v488 = vpop.permute.xlu0 %487
    %490 = vset.pattern.permute.xlu0 2
    %491 = vperm.xlu0 %490, %v47
    %v492 = vpop.permute.xlu0 %491
    %494 = vset.pattern.permute.xlu0 2
    %495 = vperm.xlu0 %494, %v48
    %v496 = vpop.permute.xlu0 %495
    %498 = vset.pattern.permute.xlu0 2
    %499 = vperm.xlu0 %498, %v49
    %v500 = vpop.permute.xlu0 %499
    %502 = vset.pattern.permute.xlu0 2
    %503 = vperm.xlu0 %502, %v50
    %v504 = vpop.permute.xlu0 %503
    %506 = vset.pattern.permute.xlu0 2
    %507 = vperm.xlu0 %506, %v51
    %v508 = vpop.permute.xlu0 %507
    %510 = vset.pattern.permute.xlu0 2
    %511 = vperm.xlu0 %510, %v52
    %v512 = vpop.permute.xlu0 %511
    %514 = vset.pattern.permute.xlu0 2
    %515 = vperm.xlu0 %514, %v53
    %v516 = vpop.permute.xlu0 %515
    %518 = vset.pattern.permute.xlu0 2
    %519 = vperm.xlu0 %518, %v54
    %v520 = vpop.permute.xlu0 %519
    %522 = vset.pattern.permute.xlu0 2
    %523 = vperm.xlu0 %522, %v55
    %v524 = vpop.permute.xlu0 %523
    %526 = vset.pattern.permute.xlu0 2
    %527 = vperm.xlu0 %526, %v56
    %v528 = vpop.permute.xlu0 %527
    %530 = vset.pattern.permute.xlu0 2
    %531 = vperm.xlu0 %530, %v57
    %v532 = vpop.permute.xlu0 %531
    %534 = vset.pattern.permute.xlu0 2
    %535 = vperm.xlu0 %534, %v58
    %v536 = vpop.permute.xlu0 %535
    %538 = vset.pattern.permute.xlu0 2
    %539 = vperm.xlu0 %538, %v59
    %v540 = vpop.permute.xlu0 %539
    %542 = vset.pattern.permute.xlu0 2
    %543 = vperm.xlu0 %542, %v60
    %v544 = vpop.permute.xlu0 %543
    %546 = vset.pattern.permute.xlu0 2
    %547 = vperm.xlu0 %546, %v61
    %v548 = vpop.permute.xlu0 %547
    %550 = vset.pattern.permute.xlu0 2
    %551 = vperm.xlu0 %550, %v62
    %v552 = vpop.permute.xlu0 %551
    %554 = vset.pattern.permute.xlu0 2
    %555 = vperm.xlu0 %554, %v63
    %v556 = vpop.permute.xlu0 %555
    %558 = vset.pattern.permute.xlu0 2
    %559 = vperm.xlu0 %558, %v64
    %v560 = vpop.permute.xlu0 %559
    %562 = vset.pattern.permute.xlu0 2
    %563 = vperm.xlu0 %562, %v65
    %v564 = vpop.permute.xlu0 %563
    %566 = vset.pattern.permute.xlu0 2
    %567 = vperm.xlu0 %566, %v66
    %v568 = vpop.permute.xlu0 %567
    %570 = vset.pattern.permute.xlu0 2
    %571 = vperm.xlu0 %570, %v67
    %v572 = vpop.permute.xlu0 %571
    %574 = vset.pattern.permute.xlu0 2
    %575 = vperm.xlu0 %574, %v68
    %v576 = vpop.permute.xlu0 %575
    %578 = vset.pattern.permute.xlu0 2
    %579 = vperm.xlu0 %578, %v69
    %v580 = vpop.permute.xlu0 %579
    %582 = vset.pattern.permute.xlu0 2
    %583 = vperm.xlu0 %582, %v70
    %v584 = vpop.permute.xlu0 %583
    %586 = vset.pattern.permute.xlu0 2
    %587 = vperm.xlu0 %586, %v71
    %v588 = vpop.permute.xlu0 %587
    %590 = vset.pattern.permute.xlu0 2
    %591 = vperm.xlu0 %590, %v72
    %v592 = vpop.permute.xlu0 %591
    %v594 = vlaneseq
    %v595 = vshrl.u32 %v594, 7
    %v596 = vsub.s32 2, %v595
    %v597 = vrot.slane %v73, %v596
    %v598 = vmul.f32 %v468, %v597
    %v599 = vmul.f32 %v472, %v597
    %v600 = vmul.f32 %v476, %v597
    %v601 = vmul.f32 %v480, %v597
    %v602 = vmul.f32 %v484, %v597
    %v603 = vmul.f32 %v488, %v597
    %v604 = vmul.f32 %v492, %v597
    %v605 = vmul.f32 %v496, %v597
    %v606 = vmul.f32 %v500, %v597
    %v607 = vmul.f32 %v504, %v597
    %v608 = vmul.f32 %v508, %v597
    %v609 = vmul.f32 %v512, %v597
    %v610 = vmul.f32 %v516, %v597
    %v611 = vmul.f32 %v520, %v597
    %v612 = vmul.f32 %v524, %v597
    %v613 = vmul.f32 %v528, %v597
    %v614 = vmul.f32 %v532, %v597
    %v615 = vmul.f32 %v536, %v597
    %v616 = vmul.f32 %v540, %v597
    %v617 = vmul.f32 %v544, %v597
    %v618 = vmul.f32 %v548, %v597
    %v619 = vmul.f32 %v552, %v597
    %v620 = vmul.f32 %v556, %v597
    %v621 = vmul.f32 %v560, %v597
    %v622 = vmul.f32 %v564, %v597
    %v623 = vmul.f32 %v568, %v597
    %v624 = vmul.f32 %v572, %v597
    %v625 = vmul.f32 %v576, %v597
    %v626 = vmul.f32 %v580, %v597
    %v627 = vmul.f32 %v584, %v597
    %v628 = vmul.f32 %v588, %v597
    %v629 = vmul.f32 %v592, %v597
    %v630 = vadd.f32 %v434, %v598
    %v631 = vadd.f32 %v435, %v599
    %v632 = vadd.f32 %v436, %v600
    %v633 = vadd.f32 %v437, %v601
    %v634 = vadd.f32 %v438, %v602
    %v635 = vadd.f32 %v439, %v603
    %v636 = vadd.f32 %v440, %v604
    %v637 = vadd.f32 %v441, %v605
    %v638 = vadd.f32 %v442, %v606
    %v639 = vadd.f32 %v443, %v607
    %v640 = vadd.f32 %v444, %v608
    %v641 = vadd.f32 %v445, %v609
    %v642 = vadd.f32 %v446, %v610
    %v643 = vadd.f32 %v447, %v611
    %v644 = vadd.f32 %v448, %v612
    %v645 = vadd.f32 %v449, %v613
    %v646 = vadd.f32 %v450, %v614
    %v647 = vadd.f32 %v451, %v615
    %v648 = vadd.f32 %v452, %v616
    %v649 = vadd.f32 %v453, %v617
    %v650 = vadd.f32 %v454, %v618
    %v651 = vadd.f32 %v455, %v619
    %v652 = vadd.f32 %v456, %v620
    %v653 = vadd.f32 %v457, %v621
    %v654 = vadd.f32 %v458, %v622
    %v655 = vadd.f32 %v459, %v623
    %v656 = vadd.f32 %v460, %v624
    %v657 = vadd.f32 %v461, %v625
    %v658 = vadd.f32 %v462, %v626
    %v659 = vadd.f32 %v463, %v627
    %v660 = vadd.f32 %v464, %v628
    %v661 = vadd.f32 %v465, %v629
    %v662 = vld [vmem:[%s2] sm:$0x1]
    %v664 = vlaneseq
    %v665 = vshrl.u32 %v664, 7
    %v666 = vsub.s32 0, %v665
    %v667 = vrot.slane %v662, %v666
    %v669 = vadd.f32 %v630, %v667
    %v670 = vadd.f32 %v631, %v667
    %v671 = vadd.f32 %v632, %v667
    %v672 = vadd.f32 %v633, %v667
    %v673 = vadd.f32 %v634, %v667
    %v674 = vadd.f32 %v635, %v667
    %v675 = vadd.f32 %v636, %v667
    %v676 = vadd.f32 %v637, %v667
    %v677 = vadd.f32 %v638, %v667
    %v678 = vadd.f32 %v639, %v667
    %v679 = vadd.f32 %v640, %v667
    %v680 = vadd.f32 %v641, %v667
    %v681 = vadd.f32 %v642, %v667
    %v682 = vadd.f32 %v643, %v667
    %v683 = vadd.f32 %v644, %v667
    %v684 = vadd.f32 %v645, %v667
    %v685 = vadd.f32 %v646, %v667
    %v686 = vadd.f32 %v647, %v667
    %v687 = vadd.f32 %v648, %v667
    %v688 = vadd.f32 %v649, %v667
    %v689 = vadd.f32 %v650, %v667
    %v690 = vadd.f32 %v651, %v667
    %v691 = vadd.f32 %v652, %v667
    %v692 = vadd.f32 %v653, %v667
    %v693 = vadd.f32 %v654, %v667
    %v694 = vadd.f32 %v655, %v667
    %v695 = vadd.f32 %v656, %v667
    %v696 = vadd.f32 %v657, %v667
    %v697 = vadd.f32 %v658, %v667
    %v698 = vadd.f32 %v659, %v667
    %v699 = vadd.f32 %v660, %v667
    %v700 = vadd.f32 %v661, %v667
    %v701 = vmax.f32 %v669, 0.0
    %v702 = vmax.f32 %v670, 0.0
    %v703 = vmax.f32 %v671, 0.0
    %v704 = vmax.f32 %v672, 0.0
    %v705 = vmax.f32 %v673, 0.0
    %v706 = vmax.f32 %v674, 0.0
    %v707 = vmax.f32 %v675, 0.0
    %v708 = vmax.f32 %v676, 0.0
    %v709 = vmax.f32 %v677, 0.0
    %v710 = vmax.f32 %v678, 0.0
    %v711 = vmax.f32 %v679, 0.0
    %v712 = vmax.f32 %v680, 0.0
    %v713 = vmax.f32 %v681, 0.0
    %v714 = vmax.f32 %v682, 0.0
    %v715 = vmax.f32 %v683, 0.0
    %v716 = vmax.f32 %v684, 0.0
    %v717 = vmax.f32 %v685, 0.0
    %v718 = vmax.f32 %v686, 0.0
    %v719 = vmax.f32 %v687, 0.0
    %v720 = vmax.f32 %v688, 0.0
    %v721 = vmax.f32 %v689, 0.0
    %v722 = vmax.f32 %v690, 0.0
    %v723 = vmax.f32 %v691, 0.0
    %v724 = vmax.f32 %v692, 0.0
    %v725 = vmax.f32 %v693, 0.0
    %v726 = vmax.f32 %v694, 0.0
    %v727 = vmax.f32 %v695, 0.0
    %v728 = vmax.f32 %v696, 0.0
    %v729 = vmax.f32 %v697, 0.0
    %v730 = vmax.f32 %v698, 0.0
    %v731 = vmax.f32 %v699, 0.0
    %v732 = vmax.f32 %v700, 0.0
    %v733 = vpack.c.bf16 %v702, %v701
    %v734 = vpack.c.bf16 %v704, %v703
    %v735 = vpack.c.bf16 %v706, %v705
    %v736 = vpack.c.bf16 %v708, %v707
    %v737 = vpack.c.bf16 %v710, %v709
    %v738 = vpack.c.bf16 %v712, %v711
    %v739 = vpack.c.bf16 %v714, %v713
    %v740 = vpack.c.bf16 %v716, %v715
    %v741 = vpack.c.bf16 %v718, %v717
    %v742 = vpack.c.bf16 %v720, %v719
    %v743 = vpack.c.bf16 %v722, %v721
    %v744 = vpack.c.bf16 %v724, %v723
    %v745 = vpack.c.bf16 %v726, %v725
    %v746 = vpack.c.bf16 %v728, %v727
    %v747 = vpack.c.bf16 %v730, %v729
    %v748 = vpack.c.bf16 %v732, %v731
    %v749 = vld [vmem:[#allocation2] sm:$0xf]
    %v750 = vld [vmem:[#allocation2 + $0x4] sm:$0xf]
    %v751 = vld [vmem:[#allocation2 + $0x8] sm:$0xf]
    %v752 = vld [vmem:[#allocation2 + $0xc] sm:$0xf]
    %v753 = vld [vmem:[#allocation2 + $0x10] sm:$0xf]
    %v754 = vld [vmem:[#allocation2 + $0x14] sm:$0xf]
    %v755 = vld [vmem:[#allocation2 + $0x18] sm:$0xf]
    %v756 = vld [vmem:[#allocation2 + $0x1c] sm:$0xf]
    %v757 = vld [vmem:[#allocation2 + $0x20] sm:$0xf]
    %v758 = vld [vmem:[#allocation2 + $0x24] sm:$0xf]
    %v759 = vld [vmem:[#allocation2 + $0x28] sm:$0xf]
    %v760 = vld [vmem:[#allocation2 + $0x2c] sm:$0xf]
    %v761 = vld [vmem:[#allocation2 + $0x30] sm:$0xf]
    %v762 = vld [vmem:[#allocation2 + $0x34] sm:$0xf]
    %v763 = vld [vmem:[#allocation2 + $0x38] sm:$0xf]
    %v764 = vld [vmem:[#allocation2 + $0x3c] sm:$0xf]
    %v765 = vld [vmem:[%s4] sm:$0x1]
    %v767 = vlaneseq
    %v768 = vshrl.u32 %v767, 7
    %v769 = vsub.s32 0, %v768
    %v770 = vrot.slane %v765, %v769
    %v788 = vunpack.c.l.b16 %v749
    %v789 = vunpack.c.l.b16 %v750
    %v790 = vunpack.c.l.b16 %v751
    %v791 = vunpack.c.l.b16 %v752
    %v792 = vunpack.c.l.b16 %v753
    %v793 = vunpack.c.l.b16 %v754
    %v794 = vunpack.c.l.b16 %v755
    %v795 = vunpack.c.l.b16 %v756
    %v796 = vunpack.c.l.b16 %v757
    %v797 = vunpack.c.l.b16 %v758
    %v798 = vunpack.c.l.b16 %v759
    %v799 = vunpack.c.l.b16 %v760
    %v800 = vunpack.c.l.b16 %v761
    %v801 = vunpack.c.l.b16 %v762
    %v802 = vunpack.c.l.b16 %v763
    %v803 = vunpack.c.l.b16 %v764
    %v804 = vpack.c.b16 %v789, %v788
    %v805 = vpack.c.b16 %v791, %v790
    %v806 = vpack.c.b16 %v793, %v792
    %v807 = vpack.c.b16 %v795, %v794
    %v808 = vpack.c.b16 %v797, %v796
    %v809 = vpack.c.b16 %v799, %v798
    %v810 = vpack.c.b16 %v801, %v800
    %v811 = vpack.c.b16 %v803, %v802
    %820 = vmatprep.subr.bf16.mxu0 0
    %821 = vmatpush1.bf16.msra.mxu0 %v804
    %822 = vmatprep.subr.bf16.mxu0 0
    %823 = vmatpush1.bf16.msra.mxu0 %v805
    %824 = vmatprep.subr.bf16.mxu0 0
    %825 = vmatpush1.bf16.msra.mxu0 %v806
    %826 = vmatprep.subr.bf16.mxu0 0
    %827 = vmatpush1.bf16.msra.mxu0 %v807
    %828 = vmatprep.subr.bf16.mxu0 0
    %829 = vmatpush1.bf16.msra.mxu0 %v808
    %830 = vmatprep.subr.bf16.mxu0 0
    %831 = vmatpush1.bf16.msra.mxu0 %v809
    %832 = vmatprep.subr.bf16.mxu0 0
    %833 = vmatpush1.bf16.msra.mxu0 %v810
    %834 = vmatprep.subr.bf16.mxu0 0
    %835 = vmatpush1.bf16.msra.mxu0 %v811
    %836 = vmatprep.subr.bf16.mxu0 0
    %837 = vmatpush1.bf16.msra.mxu0 0
    %838 = vmatprep.subr.bf16.mxu0 0
    %839 = vmatpush1.bf16.msra.mxu0 0
    %840 = vmatprep.subr.bf16.mxu0 0
    %841 = vmatpush1.bf16.msra.mxu0 0
    %842 = vmatprep.subr.bf16.mxu0 0
    %843 = vmatpush1.bf16.msra.mxu0 0
    %844 = vmatprep.subr.bf16.mxu0 0
    %845 = vmatpush1.bf16.msra.mxu0 0
    %846 = vmatprep.subr.bf16.mxu0 0
    %847 = vmatpush1.bf16.msra.mxu0 0
    %848 = vmatprep.subr.bf16.mxu0 0
    %849 = vmatpush1.bf16.msra.mxu0 0
    %850 = vmatprep.subr.bf16.mxu0 0
    %851 = vmatpush1.bf16.msra.mxu0 0
    %852 = vmatprep.mubr.bf16.mxu0 0
    %853 = vmatmul.mubr.bf16.gmra.mrb[0].mxu0 %v733
    %v854 = vpop.f32.mrb[0].mxu0
    %v855 = vadd.f32 %v770, %v854
    %v856 = vpop.f32.mrb[0].mxu0
    %v857 = vpop.f32.mrb[0].mxu0
    %v858 = vadd.f32 %v770, %v857
    %v859 = vpop.f32.mrb[0].mxu0
    %860 = vmatprep.mubr.bf16.mxu0 0
    %861 = vmatmul.mubr.bf16.gmra.mrb[0].mxu0 %v734
    %v862 = vpop.f32.mrb[0].mxu0
    %v863 = vadd.f32 %v770, %v862
    %v864 = vpop.f32.mrb[0].mxu0
    %v865 = vpop.f32.mrb[0].mxu0
    %v866 = vadd.f32 %v770, %v865
    %v867 = vpop.f32.mrb[0].mxu0
    %868 = vmatprep.mubr.bf16.mxu0 0
    %869 = vmatmul.mubr.bf16.gmra.mrb[0].mxu0 %v735
    %v870 = vpop.f32.mrb[0].mxu0
    %v871 = vadd.f32 %v770, %v870
    %v872 = vpop.f32.mrb[0].mxu0
    %v873 = vpop.f32.mrb[0].mxu0
    %v874 = vadd.f32 %v770, %v873
    %v875 = vpop.f32.mrb[0].mxu0
    %876 = vmatprep.mubr.bf16.mxu0 0
    %877 = vmatmul.mubr.bf16.gmra.mrb[0].mxu0 %v736
    %v878 = vpop.f32.mrb[0].mxu0
    %v879 = vadd.f32 %v770, %v878
    %v880 = vpop.f32.mrb[0].mxu0
    %v881 = vpop.f32.mrb[0].mxu0
    %v882 = vadd.f32 %v770, %v881
    %v883 = vpop.f32.mrb[0].mxu0
    %884 = vmatprep.mubr.bf16.mxu0 0
    %885 = vmatmul.mubr.bf16.gmra.mrb[0].mxu0 %v737
    %v886 = vpop.f32.mrb[0].mxu0
    %v887 = vadd.f32 %v770, %v886
    %v888 = vpop.f32.mrb[0].mxu0
    %v889 = vpop.f32.mrb[0].mxu0
    %v890 = vadd.f32 %v770, %v889
    %v891 = vpop.f32.mrb[0].mxu0
    %892 = vmatprep.mubr.bf16.mxu0 0
    %893 = vmatmul.mubr.bf16.gmra.mrb[0].mxu0 %v738
    %v894 = vpop.f32.mrb[0].mxu0
    %v895 = vadd.f32 %v770, %v894
    %v896 = vpop.f32.mrb[0].mxu0
    %v897 = vpop.f32.mrb[0].mxu0
    %v898 = vadd.f32 %v770, %v897
    %v899 = vpop.f32.mrb[0].mxu0
    %900 = vmatprep.mubr.bf16.mxu0 0
    %901 = vmatmul.mubr.bf16.gmra.mrb[0].mxu0 %v739
    %v902 = vpop.f32.mrb[0].mxu0
    %v903 = vadd.f32 %v770, %v902
    %v904 = vpop.f32.mrb[0].mxu0
    %v905 = vpop.f32.mrb[0].mxu0
    %v906 = vadd.f32 %v770, %v905
    %v907 = vpop.f32.mrb[0].mxu0
    %908 = vmatprep.mubr.bf16.mxu0 0
    %909 = vmatmul.mubr.bf16.gmra.mrb[0].mxu0 %v740
    %v910 = vpop.f32.mrb[0].mxu0
    %v911 = vadd.f32 %v770, %v910
    %v912 = vpop.f32.mrb[0].mxu0
    %v913 = vpop.f32.mrb[0].mxu0
    %v914 = vadd.f32 %v770, %v913
    %v915 = vpop.f32.mrb[0].mxu0
    %916 = vmatprep.mubr.bf16.mxu0 0
    %917 = vmatmul.mubr.bf16.gmra.mrb[0].mxu0 %v741
    %v918 = vpop.f32.mrb[0].mxu0
    %v919 = vadd.f32 %v770, %v918
    %v920 = vpop.f32.mrb[0].mxu0
    %v921 = vpop.f32.mrb[0].mxu0
    %v922 = vadd.f32 %v770, %v921
    %v923 = vpop.f32.mrb[0].mxu0
    %924 = vmatprep.mubr.bf16.mxu0 0
    %925 = vmatmul.mubr.bf16.gmra.mrb[0].mxu0 %v742
    %v926 = vpop.f32.mrb[0].mxu0
    %v927 = vadd.f32 %v770, %v926
    %v928 = vpop.f32.mrb[0].mxu0
    %v929 = vpop.f32.mrb[0].mxu0
    %v930 = vadd.f32 %v770, %v929
    %v931 = vpop.f32.mrb[0].mxu0
    %932 = vmatprep.mubr.bf16.mxu0 0
    %933 = vmatmul.mubr.bf16.gmra.mrb[0].mxu0 %v743
    %v934 = vpop.f32.mrb[0].mxu0
    %v935 = vadd.f32 %v770, %v934
    %v936 = vpop.f32.mrb[0].mxu0
    %v937 = vpop.f32.mrb[0].mxu0
    %v938 = vadd.f32 %v770, %v937
    %v939 = vpop.f32.mrb[0].mxu0
    %940 = vmatprep.mubr.bf16.mxu0 0
    %941 = vmatmul.mubr.bf16.gmra.mrb[0].mxu0 %v744
    %v942 = vpop.f32.mrb[0].mxu0
    %v943 = vadd.f32 %v770, %v942
    %v944 = vpop.f32.mrb[0].mxu0
    %v945 = vpop.f32.mrb[0].mxu0
    %v946 = vadd.f32 %v770, %v945
    %v947 = vpop.f32.mrb[0].mxu0
    %948 = vmatprep.mubr.bf16.mxu0 0
    %949 = vmatmul.mubr.bf16.gmra.mrb[0].mxu0 %v745
    %v950 = vpop.f32.mrb[0].mxu0
    %v951 = vadd.f32 %v770, %v950
    %v952 = vpop.f32.mrb[0].mxu0
    %v953 = vpop.f32.mrb[0].mxu0
    %v954 = vadd.f32 %v770, %v953
    %v955 = vpop.f32.mrb[0].mxu0
    %956 = vmatprep.mubr.bf16.mxu0 0
    %957 = vmatmul.mubr.bf16.gmra.mrb[0].mxu0 %v746
    %v958 = vpop.f32.mrb[0].mxu0
    %v959 = vadd.f32 %v770, %v958
    %v960 = vpop.f32.mrb[0].mxu0
    %v961 = vpop.f32.mrb[0].mxu0
    %v962 = vadd.f32 %v770, %v961
    %v963 = vpop.f32.mrb[0].mxu0
    %964 = vmatprep.mubr.bf16.mxu0 0
    %965 = vmatmul.mubr.bf16.gmra.mrb[0].mxu0 %v747
    %v966 = vpop.f32.mrb[0].mxu0
    %v967 = vadd.f32 %v770, %v966
    %v968 = vpop.f32.mrb[0].mxu0
    %v969 = vpop.f32.mrb[0].mxu0
    %v970 = vadd.f32 %v770, %v969
    %v971 = vpop.f32.mrb[0].mxu0
    %972 = vmatprep.mubr.bf16.mxu0 0
    %973 = vmatmul.mubr.bf16.gmra.mrb[0].mxu0 %v748
    %v974 = vpop.f32.mrb[0].mxu0
    %v975 = vadd.f32 %v770, %v974
    %v976 = vpop.f32.mrb[0].mxu0
    %v977 = vpop.f32.mrb[0].mxu0
    %v978 = vadd.f32 %v770, %v977
    %v979 = vpop.f32.mrb[0].mxu0
    %980 = vdwg.mxu0
    %v981 = vmax.f32 %v855, 0.0
    %v982 = vmax.f32 %v858, 0.0
    %v983 = vmax.f32 %v863, 0.0
    %v984 = vmax.f32 %v866, 0.0
    %v985 = vmax.f32 %v871, 0.0
    %v986 = vmax.f32 %v874, 0.0
    %v987 = vmax.f32 %v879, 0.0
    %v988 = vmax.f32 %v882, 0.0
    %v989 = vmax.f32 %v887, 0.0
    %v990 = vmax.f32 %v890, 0.0
    %v991 = vmax.f32 %v895, 0.0
    %v992 = vmax.f32 %v898, 0.0
    %v993 = vmax.f32 %v903, 0.0
    %v994 = vmax.f32 %v906, 0.0
    %v995 = vmax.f32 %v911, 0.0
    %v996 = vmax.f32 %v914, 0.0
    %v997 = vmax.f32 %v919, 0.0
    %v998 = vmax.f32 %v922, 0.0
    %v999 = vmax.f32 %v927, 0.0
    %v1000 = vmax.f32 %v930, 0.0
    %v1001 = vmax.f32 %v935, 0.0
    %v1002 = vmax.f32 %v938, 0.0
    %v1003 = vmax.f32 %v943, 0.0
    %v1004 = vmax.f32 %v946, 0.0
    %v1005 = vmax.f32 %v951, 0.0
    %v1006 = vmax.f32 %v954, 0.0
    %v1007 = vmax.f32 %v959, 0.0
    %v1008 = vmax.f32 %v962, 0.0
    %v1009 = vmax.f32 %v967, 0.0
    %v1010 = vmax.f32 %v970, 0.0
    %v1011 = vmax.f32 %v975, 0.0
    %v1012 = vmax.f32 %v978, 0.0
    %v1013 = vpack.c.bf16 %v982, %v981
    %v1014 = vpack.c.bf16 %v984, %v983
    %v1015 = vpack.c.bf16 %v986, %v985
    %v1016 = vpack.c.bf16 %v988, %v987
    %v1017 = vpack.c.bf16 %v990, %v989
    %v1018 = vpack.c.bf16 %v992, %v991
    %v1019 = vpack.c.bf16 %v994, %v993
    %v1020 = vpack.c.bf16 %v996, %v995
    %v1021 = vpack.c.bf16 %v998, %v997
    %v1022 = vpack.c.bf16 %v1000, %v999
    %v1023 = vpack.c.bf16 %v1002, %v1001
    %v1024 = vpack.c.bf16 %v1004, %v1003
    %v1025 = vpack.c.bf16 %v1006, %v1005
    %v1026 = vpack.c.bf16 %v1008, %v1007
    %v1027 = vpack.c.bf16 %v1010, %v1009
    %v1028 = vpack.c.bf16 %v1012, %v1011
    %s1029 = scalar_lea.vmem [#allocation2], 64
    %v1030 = vld [vmem:[%s1029] sm:$0xf]
    %v1031 = vld [vmem:[%s1029 + $0x4] sm:$0xf]
    %v1032 = vld [vmem:[%s1029 + $0x8] sm:$0xf]
    %v1033 = vld [vmem:[%s1029 + $0xc] sm:$0xf]
    %v1034 = vld [vmem:[%s1029 + $0x10] sm:$0xf]
    %v1035 = vld [vmem:[%s1029 + $0x14] sm:$0xf]
    %v1036 = vld [vmem:[%s1029 + $0x18] sm:$0xf]
    %v1037 = vld [vmem:[%s1029 + $0x1c] sm:$0xf]
    %v1038 = vld [vmem:[%s1029 + $0x20] sm:$0xf]
    %v1039 = vld [vmem:[%s1029 + $0x24] sm:$0xf]
    %v1040 = vld [vmem:[%s1029 + $0x28] sm:$0xf]
    %v1041 = vld [vmem:[%s1029 + $0x2c] sm:$0xf]
    %v1042 = vld [vmem:[%s1029 + $0x30] sm:$0xf]
    %v1043 = vld [vmem:[%s1029 + $0x34] sm:$0xf]
    %v1044 = vld [vmem:[%s1029 + $0x38] sm:$0xf]
    %v1045 = vld [vmem:[%s1029 + $0x3c] sm:$0xf]
    %s1046 = scalar_lea.vmem %s4, 1
    %v1047 = vld [vmem:[%s1046] sm:$0x1]
    %v1049 = vlaneseq
    %v1050 = vshrl.u32 %v1049, 7
    %v1051 = vsub.s32 0, %v1050
    %v1052 = vrot.slane %v1047, %v1051
    %v1070 = vunpack.c.l.b16 %v1030
    %v1071 = vunpack.c.l.b16 %v1031
    %v1072 = vunpack.c.l.b16 %v1032
    %v1073 = vunpack.c.l.b16 %v1033
    %v1074 = vunpack.c.l.b16 %v1034
    %v1075 = vunpack.c.l.b16 %v1035
    %v1076 = vunpack.c.l.b16 %v1036
    %v1077 = vunpack.c.l.b16 %v1037
    %v1078 = vunpack.c.l.b16 %v1038
    %v1079 = vunpack.c.l.b16 %v1039
    %v1080 = vunpack.c.l.b16 %v1040
    %v1081 = vunpack.c.l.b16 %v1041
    %v1082 = vunpack.c.l.b16 %v1042
    %v1083 = vunpack.c.l.b16 %v1043
    %v1084 = vunpack.c.l.b16 %v1044
    %v1085 = vunpack.c.l.b16 %v1045
    %v1086 = vpack.c.b16 %v1071, %v1070
    %v1087 = vpack.c.b16 %v1073, %v1072
    %v1088 = vpack.c.b16 %v1075, %v1074
    %v1089 = vpack.c.b16 %v1077, %v1076
    %v1090 = vpack.c.b16 %v1079, %v1078
    %v1091 = vpack.c.b16 %v1081, %v1080
    %v1092 = vpack.c.b16 %v1083, %v1082
    %v1093 = vpack.c.b16 %v1085, %v1084
    %1102 = vmatprep.subr.bf16.mxu0 0
    %1103 = vmatpush1.bf16.msra.mxu0 %v1086
    %1104 = vmatprep.subr.bf16.mxu0 0
    %1105 = vmatpush1.bf16.msra.mxu0 %v1087
    %1106 = vmatprep.subr.bf16.mxu0 0
    %1107 = vmatpush1.bf16.msra.mxu0 %v1088
    %1108 = vmatprep.subr.bf16.mxu0 0
    %1109 = vmatpush1.bf16.msra.mxu0 %v1089
    %1110 = vmatprep.subr.bf16.mxu0 0
    %1111 = vmatpush1.bf16.msra.mxu0 %v1090
    %1112 = vmatprep.subr.bf16.mxu0 0
    %1113 = vmatpush1.bf16.msra.mxu0 %v1091
    %1114 = vmatprep.subr.bf16.mxu0 0
    %1115 = vmatpush1.bf16.msra.mxu0 %v1092
    %1116 = vmatprep.subr.bf16.mxu0 0
    %1117 = vmatpush1.bf16.msra.mxu0 %v1093
    %1118 = vmatprep.subr.bf16.mxu0 0
    %1119 = vmatpush1.bf16.msra.mxu0 0
    %1120 = vmatprep.subr.bf16.mxu0 0
    %1121 = vmatpush1.bf16.msra.mxu0 0
    %1122 = vmatprep.subr.bf16.mxu0 0
    %1123 = vmatpush1.bf16.msra.mxu0 0
    %1124 = vmatprep.subr.bf16.mxu0 0
    %1125 = vmatpush1.bf16.msra.mxu0 0
    %1126 = vmatprep.subr.bf16.mxu0 0
    %1127 = vmatpush1.bf16.msra.mxu0 0
    %1128 = vmatprep.subr.bf16.mxu0 0
    %1129 = vmatpush1.bf16.msra.mxu0 0
    %1130 = vmatprep.subr.bf16.mxu0 0
    %1131 = vmatpush1.bf16.msra.mxu0 0
    %1132 = vmatprep.subr.bf16.mxu0 0
    %1133 = vmatpush1.bf16.msra.mxu0 0
    %1134 = vmatprep.mubr.bf16.mxu0 0
    %1135 = vmatmul.mubr.bf16.gmra.mrb[0].mxu0 %v1013
    %v1136 = vpop.f32.mrb[0].mxu0
    %v1137 = vadd.f32 %v1052, %v1136
    %v1138 = vpop.f32.mrb[0].mxu0
    %v1139 = vpop.f32.mrb[0].mxu0
    %v1140 = vadd.f32 %v1052, %v1139
    %v1141 = vpop.f32.mrb[0].mxu0
    %1142 = vmatprep.mubr.bf16.mxu0 0
    %1143 = vmatmul.mubr.bf16.gmra.mrb[0].mxu0 %v1014
    %v1144 = vpop.f32.mrb[0].mxu0
    %v1145 = vadd.f32 %v1052, %v1144
    %v1146 = vpop.f32.mrb[0].mxu0
    %v1147 = vpop.f32.mrb[0].mxu0
    %v1148 = vadd.f32 %v1052, %v1147
    %v1149 = vpop.f32.mrb[0].mxu0
    %1150 = vmatprep.mubr.bf16.mxu0 0
    %1151 = vmatmul.mubr.bf16.gmra.mrb[0].mxu0 %v1015
    %v1152 = vpop.f32.mrb[0].mxu0
    %v1153 = vadd.f32 %v1052, %v1152
    %v1154 = vpop.f32.mrb[0].mxu0
    %v1155 = vpop.f32.mrb[0].mxu0
    %v1156 = vadd.f32 %v1052, %v1155
    %v1157 = vpop.f32.mrb[0].mxu0
    %1158 = vmatprep.mubr.bf16.mxu0 0
    %1159 = vmatmul.mubr.bf16.gmra.mrb[0].mxu0 %v1016
    %v1160 = vpop.f32.mrb[0].mxu0
    %v1161 = vadd.f32 %v1052, %v1160
    %v1162 = vpop.f32.mrb[0].mxu0
    %v1163 = vpop.f32.mrb[0].mxu0
    %v1164 = vadd.f32 %v1052, %v1163
    %v1165 = vpop.f32.mrb[0].mxu0
    %1166 = vmatprep.mubr.bf16.mxu0 0
    %1167 = vmatmul.mubr.bf16.gmra.mrb[0].mxu0 %v1017
    %v1168 = vpop.f32.mrb[0].mxu0
    %v1169 = vadd.f32 %v1052, %v1168
    %v1170 = vpop.f32.mrb[0].mxu0
    %v1171 = vpop.f32.mrb[0].mxu0
    %v1172 = vadd.f32 %v1052, %v1171
    %v1173 = vpop.f32.mrb[0].mxu0
    %1174 = vmatprep.mubr.bf16.mxu0 0
    %1175 = vmatmul.mubr.bf16.gmra.mrb[0].mxu0 %v1018
    %v1176 = vpop.f32.mrb[0].mxu0
    %v1177 = vadd.f32 %v1052, %v1176
    %v1178 = vpop.f32.mrb[0].mxu0
    %v1179 = vpop.f32.mrb[0].mxu0
    %v1180 = vadd.f32 %v1052, %v1179
    %v1181 = vpop.f32.mrb[0].mxu0
    %1182 = vmatprep.mubr.bf16.mxu0 0
    %1183 = vmatmul.mubr.bf16.gmra.mrb[0].mxu0 %v1019
    %v1184 = vpop.f32.mrb[0].mxu0
    %v1185 = vadd.f32 %v1052, %v1184
    %v1186 = vpop.f32.mrb[0].mxu0
    %v1187 = vpop.f32.mrb[0].mxu0
    %v1188 = vadd.f32 %v1052, %v1187
    %v1189 = vpop.f32.mrb[0].mxu0
    %1190 = vmatprep.mubr.bf16.mxu0 0
    %1191 = vmatmul.mubr.bf16.gmra.mrb[0].mxu0 %v1020
    %v1192 = vpop.f32.mrb[0].mxu0
    %v1193 = vadd.f32 %v1052, %v1192
    %v1194 = vpop.f32.mrb[0].mxu0
    %v1195 = vpop.f32.mrb[0].mxu0
    %v1196 = vadd.f32 %v1052, %v1195
    %v1197 = vpop.f32.mrb[0].mxu0
    %1198 = vmatprep.mubr.bf16.mxu0 0
    %1199 = vmatmul.mubr.bf16.gmra.mrb[0].mxu0 %v1021
    %v1200 = vpop.f32.mrb[0].mxu0
    %v1201 = vadd.f32 %v1052, %v1200
    %v1202 = vpop.f32.mrb[0].mxu0
    %v1203 = vpop.f32.mrb[0].mxu0
    %v1204 = vadd.f32 %v1052, %v1203
    %v1205 = vpop.f32.mrb[0].mxu0
    %1206 = vmatprep.mubr.bf16.mxu0 0
    %1207 = vmatmul.mubr.bf16.gmra.mrb[0].mxu0 %v1022
    %v1208 = vpop.f32.mrb[0].mxu0
    %v1209 = vadd.f32 %v1052, %v1208
    %v1210 = vpop.f32.mrb[0].mxu0
    %v1211 = vpop.f32.mrb[0].mxu0
    %v1212 = vadd.f32 %v1052, %v1211
    %v1213 = vpop.f32.mrb[0].mxu0
    %1214 = vmatprep.mubr.bf16.mxu0 0
    %1215 = vmatmul.mubr.bf16.gmra.mrb[0].mxu0 %v1023
    %v1216 = vpop.f32.mrb[0].mxu0
    %v1217 = vadd.f32 %v1052, %v1216
    %v1218 = vpop.f32.mrb[0].mxu0
    %v1219 = vpop.f32.mrb[0].mxu0
    %v1220 = vadd.f32 %v1052, %v1219
    %v1221 = vpop.f32.mrb[0].mxu0
    %1222 = vmatprep.mubr.bf16.mxu0 0
    %1223 = vmatmul.mubr.bf16.gmra.mrb[0].mxu0 %v1024
    %v1224 = vpop.f32.mrb[0].mxu0
    %v1225 = vadd.f32 %v1052, %v1224
    %v1226 = vpop.f32.mrb[0].mxu0
    %v1227 = vpop.f32.mrb[0].mxu0
    %v1228 = vadd.f32 %v1052, %v1227
    %v1229 = vpop.f32.mrb[0].mxu0
    %1230 = vmatprep.mubr.bf16.mxu0 0
    %1231 = vmatmul.mubr.bf16.gmra.mrb[0].mxu0 %v1025
    %v1232 = vpop.f32.mrb[0].mxu0
    %v1233 = vadd.f32 %v1052, %v1232
    %v1234 = vpop.f32.mrb[0].mxu0
    %v1235 = vpop.f32.mrb[0].mxu0
    %v1236 = vadd.f32 %v1052, %v1235
    %v1237 = vpop.f32.mrb[0].mxu0
    %1238 = vmatprep.mubr.bf16.mxu0 0
    %1239 = vmatmul.mubr.bf16.gmra.mrb[0].mxu0 %v1026
    %v1240 = vpop.f32.mrb[0].mxu0
    %v1241 = vadd.f32 %v1052, %v1240
    %v1242 = vpop.f32.mrb[0].mxu0
    %v1243 = vpop.f32.mrb[0].mxu0
    %v1244 = vadd.f32 %v1052, %v1243
    %v1245 = vpop.f32.mrb[0].mxu0
    %1246 = vmatprep.mubr.bf16.mxu0 0
    %1247 = vmatmul.mubr.bf16.gmra.mrb[0].mxu0 %v1027
    %v1248 = vpop.f32.mrb[0].mxu0
    %v1249 = vadd.f32 %v1052, %v1248
    %v1250 = vpop.f32.mrb[0].mxu0
    %v1251 = vpop.f32.mrb[0].mxu0
    %v1252 = vadd.f32 %v1052, %v1251
    %v1253 = vpop.f32.mrb[0].mxu0
    %1254 = vmatprep.mubr.bf16.mxu0 0
    %1255 = vmatmul.mubr.bf16.gmra.mrb[0].mxu0 %v1028
    %v1256 = vpop.f32.mrb[0].mxu0
    %v1257 = vadd.f32 %v1052, %v1256
    %v1258 = vpop.f32.mrb[0].mxu0
    %v1259 = vpop.f32.mrb[0].mxu0
    %v1260 = vadd.f32 %v1052, %v1259
    %v1261 = vpop.f32.mrb[0].mxu0
    %1262 = vdwg.mxu0
    %v1263 = vmax.f32 %v1137, 0.0
    %v1264 = vmax.f32 %v1140, 0.0
    %v1265 = vmax.f32 %v1145, 0.0
    %v1266 = vmax.f32 %v1148, 0.0
    %v1267 = vmax.f32 %v1153, 0.0
    %v1268 = vmax.f32 %v1156, 0.0
    %v1269 = vmax.f32 %v1161, 0.0
    %v1270 = vmax.f32 %v1164, 0.0
    %v1271 = vmax.f32 %v1169, 0.0
    %v1272 = vmax.f32 %v1172, 0.0
    %v1273 = vmax.f32 %v1177, 0.0
    %v1274 = vmax.f32 %v1180, 0.0
    %v1275 = vmax.f32 %v1185, 0.0
    %v1276 = vmax.f32 %v1188, 0.0
    %v1277 = vmax.f32 %v1193, 0.0
    %v1278 = vmax.f32 %v1196, 0.0
    %v1279 = vmax.f32 %v1201, 0.0
    %v1280 = vmax.f32 %v1204, 0.0
    %v1281 = vmax.f32 %v1209, 0.0
    %v1282 = vmax.f32 %v1212, 0.0
    %v1283 = vmax.f32 %v1217, 0.0
    %v1284 = vmax.f32 %v1220, 0.0
    %v1285 = vmax.f32 %v1225, 0.0
    %v1286 = vmax.f32 %v1228, 0.0
    %v1287 = vmax.f32 %v1233, 0.0
    %v1288 = vmax.f32 %v1236, 0.0
    %v1289 = vmax.f32 %v1241, 0.0
    %v1290 = vmax.f32 %v1244, 0.0
    %v1291 = vmax.f32 %v1249, 0.0
    %v1292 = vmax.f32 %v1252, 0.0
    %v1293 = vmax.f32 %v1257, 0.0
    %v1294 = vmax.f32 %v1260, 0.0
    %v1295 = vpack.c.bf16 %v1264, %v1263
    %v1296 = vpack.c.bf16 %v1266, %v1265
    %v1297 = vpack.c.bf16 %v1268, %v1267
    %v1298 = vpack.c.bf16 %v1270, %v1269
    %v1299 = vpack.c.bf16 %v1272, %v1271
    %v1300 = vpack.c.bf16 %v1274, %v1273
    %v1301 = vpack.c.bf16 %v1276, %v1275
    %v1302 = vpack.c.bf16 %v1278, %v1277
    %v1303 = vpack.c.bf16 %v1280, %v1279
    %v1304 = vpack.c.bf16 %v1282, %v1281
    %v1305 = vpack.c.bf16 %v1284, %v1283
    %v1306 = vpack.c.bf16 %v1286, %v1285
    %v1307 = vpack.c.bf16 %v1288, %v1287
    %v1308 = vpack.c.bf16 %v1290, %v1289
    %v1309 = vpack.c.bf16 %v1292, %v1291
    %v1310 = vpack.c.bf16 %v1294, %v1293
    %s1311 = scalar_lea.vmem [#allocation2], 128
    %v1312 = vld [vmem:[%s1311] sm:$0xf]
    %v1313 = vld [vmem:[%s1311 + $0x4] sm:$0xf]
    %v1314 = vld [vmem:[%s1311 + $0x8] sm:$0xf]
    %v1315 = vld [vmem:[%s1311 + $0xc] sm:$0xf]
    %v1316 = vld [vmem:[%s1311 + $0x10] sm:$0xf]
    %v1317 = vld [vmem:[%s1311 + $0x14] sm:$0xf]
    %v1318 = vld [vmem:[%s1311 + $0x18] sm:$0xf]
    %v1319 = vld [vmem:[%s1311 + $0x1c] sm:$0xf]
    %v1320 = vld [vmem:[%s1311 + $0x20] sm:$0xf]
    %v1321 = vld [vmem:[%s1311 + $0x24] sm:$0xf]
    %v1322 = vld [vmem:[%s1311 + $0x28] sm:$0xf]
    %v1323 = vld [vmem:[%s1311 + $0x2c] sm:$0xf]
    %v1324 = vld [vmem:[%s1311 + $0x30] sm:$0xf]
    %v1325 = vld [vmem:[%s1311 + $0x34] sm:$0xf]
    %v1326 = vld [vmem:[%s1311 + $0x38] sm:$0xf]
    %v1327 = vld [vmem:[%s1311 + $0x3c] sm:$0xf]
    %s1328 = scalar_lea.vmem %s4, 2
    %v1329 = vld [vmem:[%s1328] sm:$0x1]
    %v1331 = vlaneseq
    %v1332 = vshrl.u32 %v1331, 7
    %v1333 = vsub.s32 0, %v1332
    %v1334 = vrot.slane %v1329, %v1333
    %v1352 = vunpack.c.l.b16 %v1312
    %v1353 = vunpack.c.l.b16 %v1313
    %v1354 = vunpack.c.l.b16 %v1314
    %v1355 = vunpack.c.l.b16 %v1315
    %v1356 = vunpack.c.l.b16 %v1316
    %v1357 = vunpack.c.l.b16 %v1317
    %v1358 = vunpack.c.l.b16 %v1318
    %v1359 = vunpack.c.l.b16 %v1319
    %v1360 = vunpack.c.l.b16 %v1320
    %v1361 = vunpack.c.l.b16 %v1321
    %v1362 = vunpack.c.l.b16 %v1322
    %v1363 = vunpack.c.l.b16 %v1323
    %v1364 = vunpack.c.l.b16 %v1324
    %v1365 = vunpack.c.l.b16 %v1325
    %v1366 = vunpack.c.l.b16 %v1326
    %v1367 = vunpack.c.l.b16 %v1327
    %v1368 = vpack.c.b16 %v1353, %v1352
    %v1369 = vpack.c.b16 %v1355, %v1354
    %v1370 = vpack.c.b16 %v1357, %v1356
    %v1371 = vpack.c.b16 %v1359, %v1358
    %v1372 = vpack.c.b16 %v1361, %v1360
    %v1373 = vpack.c.b16 %v1363, %v1362
    %v1374 = vpack.c.b16 %v1365, %v1364
    %v1375 = vpack.c.b16 %v1367, %v1366
    %1384 = vmatprep.subr.bf16.mxu0 0
    %1385 = vmatpush1.bf16.msra.mxu0 %v1368
    %1386 = vmatprep.subr.bf16.mxu0 0
    %1387 = vmatpush1.bf16.msra.mxu0 %v1369
    %1388 = vmatprep.subr.bf16.mxu0 0
    %1389 = vmatpush1.bf16.msra.mxu0 %v1370
    %1390 = vmatprep.subr.bf16.mxu0 0
    %1391 = vmatpush1.bf16.msra.mxu0 %v1371
    %1392 = vmatprep.subr.bf16.mxu0 0
    %1393 = vmatpush1.bf16.msra.mxu0 %v1372
    %1394 = vmatprep.subr.bf16.mxu0 0
    %1395 = vmatpush1.bf16.msra.mxu0 %v1373
    %1396 = vmatprep.subr.bf16.mxu0 0
    %1397 = vmatpush1.bf16.msra.mxu0 %v1374
    %1398 = vmatprep.subr.bf16.mxu0 0
    %1399 = vmatpush1.bf16.msra.mxu0 %v1375
    %1400 = vmatprep.subr.bf16.mxu0 0
    %1401 = vmatpush1.bf16.msra.mxu0 0
    %1402 = vmatprep.subr.bf16.mxu0 0
    %1403 = vmatpush1.bf16.msra.mxu0 0
    %1404 = vmatprep.subr.bf16.mxu0 0
    %1405 = vmatpush1.bf16.msra.mxu0 0
    %1406 = vmatprep.subr.bf16.mxu0 0
    %1407 = vmatpush1.bf16.msra.mxu0 0
    %1408 = vmatprep.subr.bf16.mxu0 0
    %1409 = vmatpush1.bf16.msra.mxu0 0
    %1410 = vmatprep.subr.bf16.mxu0 0
    %1411 = vmatpush1.bf16.msra.mxu0 0
    %1412 = vmatprep.subr.bf16.mxu0 0
    %1413 = vmatpush1.bf16.msra.mxu0 0
    %1414 = vmatprep.subr.bf16.mxu0 0
    %1415 = vmatpush1.bf16.msra.mxu0 0
    %1416 = vmatprep.mubr.bf16.mxu0 0
    %1417 = vmatmul.mubr.bf16.gmra.mrb[0].mxu0 %v1295
    %v1418 = vpop.f32.mrb[0].mxu0
    %v1419 = vadd.f32 %v1334, %v1418
    %v1420 = vpop.f32.mrb[0].mxu0
    %v1421 = vpop.f32.mrb[0].mxu0
    %v1422 = vadd.f32 %v1334, %v1421
    %v1423 = vpop.f32.mrb[0].mxu0
    %1424 = vmatprep.mubr.bf16.mxu0 0
    %1425 = vmatmul.mubr.bf16.gmra.mrb[0].mxu0 %v1296
    %v1426 = vpop.f32.mrb[0].mxu0
    %v1427 = vadd.f32 %v1334, %v1426
    %v1428 = vpop.f32.mrb[0].mxu0
    %v1429 = vpop.f32.mrb[0].mxu0
    %v1430 = vadd.f32 %v1334, %v1429
    %v1431 = vpop.f32.mrb[0].mxu0
    %1432 = vmatprep.mubr.bf16.mxu0 0
    %1433 = vmatmul.mubr.bf16.gmra.mrb[0].mxu0 %v1297
    %v1434 = vpop.f32.mrb[0].mxu0
    %v1435 = vadd.f32 %v1334, %v1434
    %v1436 = vpop.f32.mrb[0].mxu0
    %v1437 = vpop.f32.mrb[0].mxu0
    %v1438 = vadd.f32 %v1334, %v1437
    %v1439 = vpop.f32.mrb[0].mxu0
    %1440 = vmatprep.mubr.bf16.mxu0 0
    %1441 = vmatmul.mubr.bf16.gmra.mrb[0].mxu0 %v1298
    %v1442 = vpop.f32.mrb[0].mxu0
    %v1443 = vadd.f32 %v1334, %v1442
    %v1444 = vpop.f32.mrb[0].mxu0
    %v1445 = vpop.f32.mrb[0].mxu0
    %v1446 = vadd.f32 %v1334, %v1445
    %v1447 = vpop.f32.mrb[0].mxu0
    %1448 = vmatprep.mubr.bf16.mxu0 0
    %1449 = vmatmul.mubr.bf16.gmra.mrb[0].mxu0 %v1299
    %v1450 = vpop.f32.mrb[0].mxu0
    %v1451 = vadd.f32 %v1334, %v1450
    %v1452 = vpop.f32.mrb[0].mxu0
    %v1453 = vpop.f32.mrb[0].mxu0
    %v1454 = vadd.f32 %v1334, %v1453
    %v1455 = vpop.f32.mrb[0].mxu0
    %1456 = vmatprep.mubr.bf16.mxu0 0
    %1457 = vmatmul.mubr.bf16.gmra.mrb[0].mxu0 %v1300
    %v1458 = vpop.f32.mrb[0].mxu0
    %v1459 = vadd.f32 %v1334, %v1458
    %v1460 = vpop.f32.mrb[0].mxu0
    %v1461 = vpop.f32.mrb[0].mxu0
    %v1462 = vadd.f32 %v1334, %v1461
    %v1463 = vpop.f32.mrb[0].mxu0
    %1464 = vmatprep.mubr.bf16.mxu0 0
    %1465 = vmatmul.mubr.bf16.gmra.mrb[0].mxu0 %v1301
    %v1466 = vpop.f32.mrb[0].mxu0
    %v1467 = vadd.f32 %v1334, %v1466
    %v1468 = vpop.f32.mrb[0].mxu0
    %v1469 = vpop.f32.mrb[0].mxu0
    %v1470 = vadd.f32 %v1334, %v1469
    %v1471 = vpop.f32.mrb[0].mxu0
    %1472 = vmatprep.mubr.bf16.mxu0 0
    %1473 = vmatmul.mubr.bf16.gmra.mrb[0].mxu0 %v1302
    %v1474 = vpop.f32.mrb[0].mxu0
    %v1475 = vadd.f32 %v1334, %v1474
    %v1476 = vpop.f32.mrb[0].mxu0
    %v1477 = vpop.f32.mrb[0].mxu0
    %v1478 = vadd.f32 %v1334, %v1477
    %v1479 = vpop.f32.mrb[0].mxu0
    %1480 = vmatprep.mubr.bf16.mxu0 0
    %1481 = vmatmul.mubr.bf16.gmra.mrb[0].mxu0 %v1303
    %v1482 = vpop.f32.mrb[0].mxu0
    %v1483 = vadd.f32 %v1334, %v1482
    %v1484 = vpop.f32.mrb[0].mxu0
    %v1485 = vpop.f32.mrb[0].mxu0
    %v1486 = vadd.f32 %v1334, %v1485
    %v1487 = vpop.f32.mrb[0].mxu0
    %1488 = vmatprep.mubr.bf16.mxu0 0
    %1489 = vmatmul.mubr.bf16.gmra.mrb[0].mxu0 %v1304
    %v1490 = vpop.f32.mrb[0].mxu0
    %v1491 = vadd.f32 %v1334, %v1490
    %v1492 = vpop.f32.mrb[0].mxu0
    %v1493 = vpop.f32.mrb[0].mxu0
    %v1494 = vadd.f32 %v1334, %v1493
    %v1495 = vpop.f32.mrb[0].mxu0
    %1496 = vmatprep.mubr.bf16.mxu0 0
    %1497 = vmatmul.mubr.bf16.gmra.mrb[0].mxu0 %v1305
    %v1498 = vpop.f32.mrb[0].mxu0
    %v1499 = vadd.f32 %v1334, %v1498
    %v1500 = vpop.f32.mrb[0].mxu0
    %v1501 = vpop.f32.mrb[0].mxu0
    %v1502 = vadd.f32 %v1334, %v1501
    %v1503 = vpop.f32.mrb[0].mxu0
    %1504 = vmatprep.mubr.bf16.mxu0 0
    %1505 = vmatmul.mubr.bf16.gmra.mrb[0].mxu0 %v1306
    %v1506 = vpop.f32.mrb[0].mxu0
    %v1507 = vadd.f32 %v1334, %v1506
    %v1508 = vpop.f32.mrb[0].mxu0
    %v1509 = vpop.f32.mrb[0].mxu0
    %v1510 = vadd.f32 %v1334, %v1509
    %v1511 = vpop.f32.mrb[0].mxu0
    %1512 = vmatprep.mubr.bf16.mxu0 0
    %1513 = vmatmul.mubr.bf16.gmra.mrb[0].mxu0 %v1307
    %v1514 = vpop.f32.mrb[0].mxu0
    %v1515 = vadd.f32 %v1334, %v1514
    %v1516 = vpop.f32.mrb[0].mxu0
    %v1517 = vpop.f32.mrb[0].mxu0
    %v1518 = vadd.f32 %v1334, %v1517
    %v1519 = vpop.f32.mrb[0].mxu0
    %1520 = vmatprep.mubr.bf16.mxu0 0
    %1521 = vmatmul.mubr.bf16.gmra.mrb[0].mxu0 %v1308
    %v1522 = vpop.f32.mrb[0].mxu0
    %v1523 = vadd.f32 %v1334, %v1522
    %v1524 = vpop.f32.mrb[0].mxu0
    %v1525 = vpop.f32.mrb[0].mxu0
    %v1526 = vadd.f32 %v1334, %v1525
    %v1527 = vpop.f32.mrb[0].mxu0
    %1528 = vmatprep.mubr.bf16.mxu0 0
    %1529 = vmatmul.mubr.bf16.gmra.mrb[0].mxu0 %v1309
    %v1530 = vpop.f32.mrb[0].mxu0
    %v1531 = vadd.f32 %v1334, %v1530
    %v1532 = vpop.f32.mrb[0].mxu0
    %v1533 = vpop.f32.mrb[0].mxu0
    %v1534 = vadd.f32 %v1334, %v1533
    %v1535 = vpop.f32.mrb[0].mxu0
    %1536 = vmatprep.mubr.bf16.mxu0 0
    %1537 = vmatmul.mubr.bf16.gmra.mrb[0].mxu0 %v1310
    %v1538 = vpop.f32.mrb[0].mxu0
    %v1539 = vadd.f32 %v1334, %v1538
    %v1540 = vpop.f32.mrb[0].mxu0
    %v1541 = vpop.f32.mrb[0].mxu0
    %v1542 = vadd.f32 %v1334, %v1541
    %v1543 = vpop.f32.mrb[0].mxu0
    %1544 = vdwg.mxu0
    %v1545 = vmax.f32 %v1419, 0.0
    %v1546 = vmax.f32 %v1422, 0.0
    %v1547 = vmax.f32 %v1427, 0.0
    %v1548 = vmax.f32 %v1430, 0.0
    %v1549 = vmax.f32 %v1435, 0.0
    %v1550 = vmax.f32 %v1438, 0.0
    %v1551 = vmax.f32 %v1443, 0.0
    %v1552 = vmax.f32 %v1446, 0.0
    %v1553 = vmax.f32 %v1451, 0.0
    %v1554 = vmax.f32 %v1454, 0.0
    %v1555 = vmax.f32 %v1459, 0.0
    %v1556 = vmax.f32 %v1462, 0.0
    %v1557 = vmax.f32 %v1467, 0.0
    %v1558 = vmax.f32 %v1470, 0.0
    %v1559 = vmax.f32 %v1475, 0.0
    %v1560 = vmax.f32 %v1478, 0.0
    %v1561 = vmax.f32 %v1483, 0.0
    %v1562 = vmax.f32 %v1486, 0.0
    %v1563 = vmax.f32 %v1491, 0.0
    %v1564 = vmax.f32 %v1494, 0.0
    %v1565 = vmax.f32 %v1499, 0.0
    %v1566 = vmax.f32 %v1502, 0.0
    %v1567 = vmax.f32 %v1507, 0.0
    %v1568 = vmax.f32 %v1510, 0.0
    %v1569 = vmax.f32 %v1515, 0.0
    %v1570 = vmax.f32 %v1518, 0.0
    %v1571 = vmax.f32 %v1523, 0.0
    %v1572 = vmax.f32 %v1526, 0.0
    %v1573 = vmax.f32 %v1531, 0.0
    %v1574 = vmax.f32 %v1534, 0.0
    %v1575 = vmax.f32 %v1539, 0.0
    %v1576 = vmax.f32 %v1542, 0.0
    %v1577 = vpack.c.bf16 %v1546, %v1545
    %v1578 = vpack.c.bf16 %v1548, %v1547
    %v1579 = vpack.c.bf16 %v1550, %v1549
    %v1580 = vpack.c.bf16 %v1552, %v1551
    %v1581 = vpack.c.bf16 %v1554, %v1553
    %v1582 = vpack.c.bf16 %v1556, %v1555
    %v1583 = vpack.c.bf16 %v1558, %v1557
    %v1584 = vpack.c.bf16 %v1560, %v1559
    %v1585 = vpack.c.bf16 %v1562, %v1561
    %v1586 = vpack.c.bf16 %v1564, %v1563
    %v1587 = vpack.c.bf16 %v1566, %v1565
    %v1588 = vpack.c.bf16 %v1568, %v1567
    %v1589 = vpack.c.bf16 %v1570, %v1569
    %v1590 = vpack.c.bf16 %v1572, %v1571
    %v1591 = vpack.c.bf16 %v1574, %v1573
    %v1592 = vpack.c.bf16 %v1576, %v1575
    %s1593 = scalar_lea.vmem [#allocation2], 192
    %v1594 = vld [vmem:[%s1593] sm:$0xf]
    %v1595 = vld [vmem:[%s1593 + $0x4] sm:$0xf]
    %v1596 = vld [vmem:[%s1593 + $0x8] sm:$0xf]
    %v1597 = vld [vmem:[%s1593 + $0xc] sm:$0xf]
    %v1598 = vld [vmem:[%s1593 + $0x10] sm:$0xf]
    %v1599 = vld [vmem:[%s1593 + $0x14] sm:$0xf]
    %v1600 = vld [vmem:[%s1593 + $0x18] sm:$0xf]
    %v1601 = vld [vmem:[%s1593 + $0x1c] sm:$0xf]
    %v1602 = vld [vmem:[%s1593 + $0x20] sm:$0xf]
    %v1603 = vld [vmem:[%s1593 + $0x24] sm:$0xf]
    %v1604 = vld [vmem:[%s1593 + $0x28] sm:$0xf]
    %v1605 = vld [vmem:[%s1593 + $0x2c] sm:$0xf]
    %v1606 = vld [vmem:[%s1593 + $0x30] sm:$0xf]
    %v1607 = vld [vmem:[%s1593 + $0x34] sm:$0xf]
    %v1608 = vld [vmem:[%s1593 + $0x38] sm:$0xf]
    %v1609 = vld [vmem:[%s1593 + $0x3c] sm:$0xf]
    %s1610 = scalar_lea.vmem %s4, 3
    %v1611 = vld [vmem:[%s1610] sm:$0x1]
    %v1613 = vlaneseq
    %v1614 = vshrl.u32 %v1613, 7
    %v1615 = vsub.s32 0, %v1614
    %v1616 = vrot.slane %v1611, %v1615
    %v1634 = vunpack.c.l.b16 %v1594
    %v1635 = vunpack.c.l.b16 %v1595
    %v1636 = vunpack.c.l.b16 %v1596
    %v1637 = vunpack.c.l.b16 %v1597
    %v1638 = vunpack.c.l.b16 %v1598
    %v1639 = vunpack.c.l.b16 %v1599
    %v1640 = vunpack.c.l.b16 %v1600
    %v1641 = vunpack.c.l.b16 %v1601
    %v1642 = vunpack.c.l.b16 %v1602
    %v1643 = vunpack.c.l.b16 %v1603
    %v1644 = vunpack.c.l.b16 %v1604
    %v1645 = vunpack.c.l.b16 %v1605
    %v1646 = vunpack.c.l.b16 %v1606
    %v1647 = vunpack.c.l.b16 %v1607
    %v1648 = vunpack.c.l.b16 %v1608
    %v1649 = vunpack.c.l.b16 %v1609
    %v1650 = vpack.c.b16 %v1635, %v1634
    %v1651 = vpack.c.b16 %v1637, %v1636
    %v1652 = vpack.c.b16 %v1639, %v1638
    %v1653 = vpack.c.b16 %v1641, %v1640
    %v1654 = vpack.c.b16 %v1643, %v1642
    %v1655 = vpack.c.b16 %v1645, %v1644
    %v1656 = vpack.c.b16 %v1647, %v1646
    %v1657 = vpack.c.b16 %v1649, %v1648
    %1666 = vmatprep.subr.bf16.mxu0 0
    %1667 = vmatpush1.bf16.msra.mxu0 %v1650
    %1668 = vmatprep.subr.bf16.mxu0 0
    %1669 = vmatpush1.bf16.msra.mxu0 %v1651
    %1670 = vmatprep.subr.bf16.mxu0 0
    %1671 = vmatpush1.bf16.msra.mxu0 %v1652
    %1672 = vmatprep.subr.bf16.mxu0 0
    %1673 = vmatpush1.bf16.msra.mxu0 %v1653
    %1674 = vmatprep.subr.bf16.mxu0 0
    %1675 = vmatpush1.bf16.msra.mxu0 %v1654
    %1676 = vmatprep.subr.bf16.mxu0 0
    %1677 = vmatpush1.bf16.msra.mxu0 %v1655
    %1678 = vmatprep.subr.bf16.mxu0 0
    %1679 = vmatpush1.bf16.msra.mxu0 %v1656
    %1680 = vmatprep.subr.bf16.mxu0 0
    %1681 = vmatpush1.bf16.msra.mxu0 %v1657
    %1682 = vmatprep.subr.bf16.mxu0 0
    %1683 = vmatpush1.bf16.msra.mxu0 0
    %1684 = vmatprep.subr.bf16.mxu0 0
    %1685 = vmatpush1.bf16.msra.mxu0 0
    %1686 = vmatprep.subr.bf16.mxu0 0
    %1687 = vmatpush1.bf16.msra.mxu0 0
    %1688 = vmatprep.subr.bf16.mxu0 0
    %1689 = vmatpush1.bf16.msra.mxu0 0
    %1690 = vmatprep.subr.bf16.mxu0 0
    %1691 = vmatpush1.bf16.msra.mxu0 0
    %1692 = vmatprep.subr.bf16.mxu0 0
    %1693 = vmatpush1.bf16.msra.mxu0 0
    %1694 = vmatprep.subr.bf16.mxu0 0
    %1695 = vmatpush1.bf16.msra.mxu0 0
    %1696 = vmatprep.subr.bf16.mxu0 0
    %1697 = vmatpush1.bf16.msra.mxu0 0
    %1698 = vmatprep.mubr.bf16.mxu0 0
    %1699 = vmatmul.mubr.bf16.gmra.mrb[0].mxu0 %v1577
    %v1700 = vpop.f32.mrb[0].mxu0
    %v1701 = vadd.f32 %v1616, %v1700
    %v1702 = vpop.f32.mrb[0].mxu0
    %v1703 = vpop.f32.mrb[0].mxu0
    %v1704 = vadd.f32 %v1616, %v1703
    %v1705 = vpop.f32.mrb[0].mxu0
    %1706 = vmatprep.mubr.bf16.mxu0 0
    %1707 = vmatmul.mubr.bf16.gmra.mrb[0].mxu0 %v1578
    %v1708 = vpop.f32.mrb[0].mxu0
    %v1709 = vadd.f32 %v1616, %v1708
    %v1710 = vpop.f32.mrb[0].mxu0
    %v1711 = vpop.f32.mrb[0].mxu0
    %v1712 = vadd.f32 %v1616, %v1711
    %v1713 = vpop.f32.mrb[0].mxu0
    %1714 = vmatprep.mubr.bf16.mxu0 0
    %1715 = vmatmul.mubr.bf16.gmra.mrb[0].mxu0 %v1579
    %v1716 = vpop.f32.mrb[0].mxu0
    %v1717 = vadd.f32 %v1616, %v1716
    %v1718 = vpop.f32.mrb[0].mxu0
    %v1719 = vpop.f32.mrb[0].mxu0
    %v1720 = vadd.f32 %v1616, %v1719
    %v1721 = vpop.f32.mrb[0].mxu0
    %1722 = vmatprep.mubr.bf16.mxu0 0
    %1723 = vmatmul.mubr.bf16.gmra.mrb[0].mxu0 %v1580
    %v1724 = vpop.f32.mrb[0].mxu0
    %v1725 = vadd.f32 %v1616, %v1724
    %v1726 = vpop.f32.mrb[0].mxu0
    %v1727 = vpop.f32.mrb[0].mxu0
    %v1728 = vadd.f32 %v1616, %v1727
    %v1729 = vpop.f32.mrb[0].mxu0
    %1730 = vmatprep.mubr.bf16.mxu0 0
    %1731 = vmatmul.mubr.bf16.gmra.mrb[0].mxu0 %v1581
    %v1732 = vpop.f32.mrb[0].mxu0
    %v1733 = vadd.f32 %v1616, %v1732
    %v1734 = vpop.f32.mrb[0].mxu0
    %v1735 = vpop.f32.mrb[0].mxu0
    %v1736 = vadd.f32 %v1616, %v1735
    %v1737 = vpop.f32.mrb[0].mxu0
    %1738 = vmatprep.mubr.bf16.mxu0 0
    %1739 = vmatmul.mubr.bf16.gmra.mrb[0].mxu0 %v1582
    %v1740 = vpop.f32.mrb[0].mxu0
    %v1741 = vadd.f32 %v1616, %v1740
    %v1742 = vpop.f32.mrb[0].mxu0
    %v1743 = vpop.f32.mrb[0].mxu0
    %v1744 = vadd.f32 %v1616, %v1743
    %v1745 = vpop.f32.mrb[0].mxu0
    %1746 = vmatprep.mubr.bf16.mxu0 0
    %1747 = vmatmul.mubr.bf16.gmra.mrb[0].mxu0 %v1583
    %v1748 = vpop.f32.mrb[0].mxu0
    %v1749 = vadd.f32 %v1616, %v1748
    %v1750 = vpop.f32.mrb[0].mxu0
    %v1751 = vpop.f32.mrb[0].mxu0
    %v1752 = vadd.f32 %v1616, %v1751
    %v1753 = vpop.f32.mrb[0].mxu0
    %1754 = vmatprep.mubr.bf16.mxu0 0
    %1755 = vmatmul.mubr.bf16.gmra.mrb[0].mxu0 %v1584
    %v1756 = vpop.f32.mrb[0].mxu0
    %v1757 = vadd.f32 %v1616, %v1756
    %v1758 = vpop.f32.mrb[0].mxu0
    %v1759 = vpop.f32.mrb[0].mxu0
    %v1760 = vadd.f32 %v1616, %v1759
    %v1761 = vpop.f32.mrb[0].mxu0
    %1762 = vmatprep.mubr.bf16.mxu0 0
    %1763 = vmatmul.mubr.bf16.gmra.mrb[0].mxu0 %v1585
    %v1764 = vpop.f32.mrb[0].mxu0
    %v1765 = vadd.f32 %v1616, %v1764
    %v1766 = vpop.f32.mrb[0].mxu0
    %v1767 = vpop.f32.mrb[0].mxu0
    %v1768 = vadd.f32 %v1616, %v1767
    %v1769 = vpop.f32.mrb[0].mxu0
    %1770 = vmatprep.mubr.bf16.mxu0 0
    %1771 = vmatmul.mubr.bf16.gmra.mrb[0].mxu0 %v1586
    %v1772 = vpop.f32.mrb[0].mxu0
    %v1773 = vadd.f32 %v1616, %v1772
    %v1774 = vpop.f32.mrb[0].mxu0
    %v1775 = vpop.f32.mrb[0].mxu0
    %v1776 = vadd.f32 %v1616, %v1775
    %v1777 = vpop.f32.mrb[0].mxu0
    %1778 = vmatprep.mubr.bf16.mxu0 0
    %1779 = vmatmul.mubr.bf16.gmra.mrb[0].mxu0 %v1587
    %v1780 = vpop.f32.mrb[0].mxu0
    %v1781 = vadd.f32 %v1616, %v1780
    %v1782 = vpop.f32.mrb[0].mxu0
    %v1783 = vpop.f32.mrb[0].mxu0
    %v1784 = vadd.f32 %v1616, %v1783
    %v1785 = vpop.f32.mrb[0].mxu0
    %1786 = vmatprep.mubr.bf16.mxu0 0
    %1787 = vmatmul.mubr.bf16.gmra.mrb[0].mxu0 %v1588
    %v1788 = vpop.f32.mrb[0].mxu0
    %v1789 = vadd.f32 %v1616, %v1788
    %v1790 = vpop.f32.mrb[0].mxu0
    %v1791 = vpop.f32.mrb[0].mxu0
    %v1792 = vadd.f32 %v1616, %v1791
    %v1793 = vpop.f32.mrb[0].mxu0
    %1794 = vmatprep.mubr.bf16.mxu0 0
    %1795 = vmatmul.mubr.bf16.gmra.mrb[0].mxu0 %v1589
    %v1796 = vpop.f32.mrb[0].mxu0
    %v1797 = vadd.f32 %v1616, %v1796
    %v1798 = vpop.f32.mrb[0].mxu0
    %v1799 = vpop.f32.mrb[0].mxu0
    %v1800 = vadd.f32 %v1616, %v1799
    %v1801 = vpop.f32.mrb[0].mxu0
    %1802 = vmatprep.mubr.bf16.mxu0 0
    %1803 = vmatmul.mubr.bf16.gmra.mrb[0].mxu0 %v1590
    %v1804 = vpop.f32.mrb[0].mxu0
    %v1805 = vadd.f32 %v1616, %v1804
    %v1806 = vpop.f32.mrb[0].mxu0
    %v1807 = vpop.f32.mrb[0].mxu0
    %v1808 = vadd.f32 %v1616, %v1807
    %v1809 = vpop.f32.mrb[0].mxu0
    %1810 = vmatprep.mubr.bf16.mxu0 0
    %1811 = vmatmul.mubr.bf16.gmra.mrb[0].mxu0 %v1591
    %v1812 = vpop.f32.mrb[0].mxu0
    %v1813 = vadd.f32 %v1616, %v1812
    %v1814 = vpop.f32.mrb[0].mxu0
    %v1815 = vpop.f32.mrb[0].mxu0
    %v1816 = vadd.f32 %v1616, %v1815
    %v1817 = vpop.f32.mrb[0].mxu0
    %1818 = vmatprep.mubr.bf16.mxu0 0
    %1819 = vmatmul.mubr.bf16.gmra.mrb[0].mxu0 %v1592
    %v1820 = vpop.f32.mrb[0].mxu0
    %v1821 = vadd.f32 %v1616, %v1820
    %v1822 = vpop.f32.mrb[0].mxu0
    %v1823 = vpop.f32.mrb[0].mxu0
    %v1824 = vadd.f32 %v1616, %v1823
    %v1825 = vpop.f32.mrb[0].mxu0
    %1826 = vdwg.mxu0
    %v1827 = vmax.f32 %v1701, 0.0
    %v1828 = vmax.f32 %v1704, 0.0
    %v1829 = vmax.f32 %v1709, 0.0
    %v1830 = vmax.f32 %v1712, 0.0
    %v1831 = vmax.f32 %v1717, 0.0
    %v1832 = vmax.f32 %v1720, 0.0
    %v1833 = vmax.f32 %v1725, 0.0
    %v1834 = vmax.f32 %v1728, 0.0
    %v1835 = vmax.f32 %v1733, 0.0
    %v1836 = vmax.f32 %v1736, 0.0
    %v1837 = vmax.f32 %v1741, 0.0
    %v1838 = vmax.f32 %v1744, 0.0
    %v1839 = vmax.f32 %v1749, 0.0
    %v1840 = vmax.f32 %v1752, 0.0
    %v1841 = vmax.f32 %v1757, 0.0
    %v1842 = vmax.f32 %v1760, 0.0
    %v1843 = vmax.f32 %v1765, 0.0
    %v1844 = vmax.f32 %v1768, 0.0
    %v1845 = vmax.f32 %v1773, 0.0
    %v1846 = vmax.f32 %v1776, 0.0
    %v1847 = vmax.f32 %v1781, 0.0
    %v1848 = vmax.f32 %v1784, 0.0
    %v1849 = vmax.f32 %v1789, 0.0
    %v1850 = vmax.f32 %v1792, 0.0
    %v1851 = vmax.f32 %v1797, 0.0
    %v1852 = vmax.f32 %v1800, 0.0
    %v1853 = vmax.f32 %v1805, 0.0
    %v1854 = vmax.f32 %v1808, 0.0
    %v1855 = vmax.f32 %v1813, 0.0
    %v1856 = vmax.f32 %v1816, 0.0
    %v1857 = vmax.f32 %v1821, 0.0
    %v1858 = vmax.f32 %v1824, 0.0
    %v1859 = vpack.c.bf16 %v1828, %v1827
    %v1860 = vpack.c.bf16 %v1830, %v1829
    %v1861 = vpack.c.bf16 %v1832, %v1831
    %v1862 = vpack.c.bf16 %v1834, %v1833
    %v1863 = vpack.c.bf16 %v1836, %v1835
    %v1864 = vpack.c.bf16 %v1838, %v1837
    %v1865 = vpack.c.bf16 %v1840, %v1839
    %v1866 = vpack.c.bf16 %v1842, %v1841
    %v1867 = vpack.c.bf16 %v1844, %v1843
    %v1868 = vpack.c.bf16 %v1846, %v1845
    %v1869 = vpack.c.bf16 %v1848, %v1847
    %v1870 = vpack.c.bf16 %v1850, %v1849
    %v1871 = vpack.c.bf16 %v1852, %v1851
    %v1872 = vpack.c.bf16 %v1854, %v1853
    %v1873 = vpack.c.bf16 %v1856, %v1855
    %v1874 = vpack.c.bf16 %v1858, %v1857
    %s1875 = scalar_lea.vmem [#allocation2], 256
    %v1876 = vld [vmem:[%s1875] sm:$0xf]
    %v1877 = vld [vmem:[%s1875 + $0x4] sm:$0xf]
    %v1878 = vld [vmem:[%s1875 + $0x8] sm:$0xf]
    %v1879 = vld [vmem:[%s1875 + $0xc] sm:$0xf]
    %v1880 = vld [vmem:[%s1875 + $0x10] sm:$0xf]
    %v1881 = vld [vmem:[%s1875 + $0x14] sm:$0xf]
    %v1882 = vld [vmem:[%s1875 + $0x18] sm:$0xf]
    %v1883 = vld [vmem:[%s1875 + $0x1c] sm:$0xf]
    %v1884 = vld [vmem:[%s1875 + $0x20] sm:$0xf]
    %v1885 = vld [vmem:[%s1875 + $0x24] sm:$0xf]
    %v1886 = vld [vmem:[%s1875 + $0x28] sm:$0xf]
    %v1887 = vld [vmem:[%s1875 + $0x2c] sm:$0xf]
    %v1888 = vld [vmem:[%s1875 + $0x30] sm:$0xf]
    %v1889 = vld [vmem:[%s1875 + $0x34] sm:$0xf]
    %v1890 = vld [vmem:[%s1875 + $0x38] sm:$0xf]
    %v1891 = vld [vmem:[%s1875 + $0x3c] sm:$0xf]
    %s1892 = scalar_lea.vmem %s4, 4
    %v1893 = vld [vmem:[%s1892] sm:$0x1]
    %v1895 = vlaneseq
    %v1896 = vshrl.u32 %v1895, 7
    %v1897 = vsub.s32 0, %v1896
    %v1898 = vrot.slane %v1893, %v1897
    %v1916 = vunpack.c.l.b16 %v1876
    %v1917 = vunpack.c.l.b16 %v1877
    %v1918 = vunpack.c.l.b16 %v1878
    %v1919 = vunpack.c.l.b16 %v1879
    %v1920 = vunpack.c.l.b16 %v1880
    %v1921 = vunpack.c.l.b16 %v1881
    %v1922 = vunpack.c.l.b16 %v1882
    %v1923 = vunpack.c.l.b16 %v1883
    %v1924 = vunpack.c.l.b16 %v1884
    %v1925 = vunpack.c.l.b16 %v1885
    %v1926 = vunpack.c.l.b16 %v1886
    %v1927 = vunpack.c.l.b16 %v1887
    %v1928 = vunpack.c.l.b16 %v1888
    %v1929 = vunpack.c.l.b16 %v1889
    %v1930 = vunpack.c.l.b16 %v1890
    %v1931 = vunpack.c.l.b16 %v1891
    %v1932 = vpack.c.b16 %v1917, %v1916
    %v1933 = vpack.c.b16 %v1919, %v1918
    %v1934 = vpack.c.b16 %v1921, %v1920
    %v1935 = vpack.c.b16 %v1923, %v1922
    %v1936 = vpack.c.b16 %v1925, %v1924
    %v1937 = vpack.c.b16 %v1927, %v1926
    %v1938 = vpack.c.b16 %v1929, %v1928
    %v1939 = vpack.c.b16 %v1931, %v1930
    %1948 = vmatprep.subr.bf16.mxu0 0
    %1949 = vmatpush1.bf16.msra.mxu0 %v1932
    %1950 = vmatprep.subr.bf16.mxu0 0
    %1951 = vmatpush1.bf16.msra.mxu0 %v1933
    %1952 = vmatprep.subr.bf16.mxu0 0
    %1953 = vmatpush1.bf16.msra.mxu0 %v1934
    %1954 = vmatprep.subr.bf16.mxu0 0
    %1955 = vmatpush1.bf16.msra.mxu0 %v1935
    %1956 = vmatprep.subr.bf16.mxu0 0
    %1957 = vmatpush1.bf16.msra.mxu0 %v1936
    %1958 = vmatprep.subr.bf16.mxu0 0
    %1959 = vmatpush1.bf16.msra.mxu0 %v1937
    %1960 = vmatprep.subr.bf16.mxu0 0
    %1961 = vmatpush1.bf16.msra.mxu0 %v1938
    %1962 = vmatprep.subr.bf16.mxu0 0
    %1963 = vmatpush1.bf16.msra.mxu0 %v1939
    %1964 = vmatprep.subr.bf16.mxu0 0
    %1965 = vmatpush1.bf16.msra.mxu0 0
    %1966 = vmatprep.subr.bf16.mxu0 0
    %1967 = vmatpush1.bf16.msra.mxu0 0
    %1968 = vmatprep.subr.bf16.mxu0 0
    %1969 = vmatpush1.bf16.msra.mxu0 0
    %1970 = vmatprep.subr.bf16.mxu0 0
    %1971 = vmatpush1.bf16.msra.mxu0 0
    %1972 = vmatprep.subr.bf16.mxu0 0
    %1973 = vmatpush1.bf16.msra.mxu0 0
    %1974 = vmatprep.subr.bf16.mxu0 0
    %1975 = vmatpush1.bf16.msra.mxu0 0
    %1976 = vmatprep.subr.bf16.mxu0 0
    %1977 = vmatpush1.bf16.msra.mxu0 0
    %1978 = vmatprep.subr.bf16.mxu0 0
    %1979 = vmatpush1.bf16.msra.mxu0 0
    %1980 = vmatprep.mubr.bf16.mxu0 0
    %1981 = vmatmul.mubr.bf16.gmra.mrb[0].mxu0 %v1859
    %v1982 = vpop.f32.mrb[0].mxu0
    %v1983 = vadd.f32 %v1898, %v1982
    %v1984 = vpop.f32.mrb[0].mxu0
    %v1985 = vpop.f32.mrb[0].mxu0
    %v1986 = vadd.f32 %v1898, %v1985
    %v1987 = vpop.f32.mrb[0].mxu0
    %1988 = vmatprep.mubr.bf16.mxu0 0
    %1989 = vmatmul.mubr.bf16.gmra.mrb[0].mxu0 %v1860
    %v1990 = vpop.f32.mrb[0].mxu0
    %v1991 = vadd.f32 %v1898, %v1990
    %v1992 = vpop.f32.mrb[0].mxu0
    %v1993 = vpop.f32.mrb[0].mxu0
    %v1994 = vadd.f32 %v1898, %v1993
    %v1995 = vpop.f32.mrb[0].mxu0
    %1996 = vmatprep.mubr.bf16.mxu0 0
    %1997 = vmatmul.mubr.bf16.gmra.mrb[0].mxu0 %v1861
    %v1998 = vpop.f32.mrb[0].mxu0
    %v1999 = vadd.f32 %v1898, %v1998
    %v2000 = vpop.f32.mrb[0].mxu0
    %v2001 = vpop.f32.mrb[0].mxu0
    %v2002 = vadd.f32 %v1898, %v2001
    %v2003 = vpop.f32.mrb[0].mxu0
    %2004 = vmatprep.mubr.bf16.mxu0 0
    %2005 = vmatmul.mubr.bf16.gmra.mrb[0].mxu0 %v1862
    %v2006 = vpop.f32.mrb[0].mxu0
    %v2007 = vadd.f32 %v1898, %v2006
    %v2008 = vpop.f32.mrb[0].mxu0
    %v2009 = vpop.f32.mrb[0].mxu0
    %v2010 = vadd.f32 %v1898, %v2009
    %v2011 = vpop.f32.mrb[0].mxu0
    %2012 = vmatprep.mubr.bf16.mxu0 0
    %2013 = vmatmul.mubr.bf16.gmra.mrb[0].mxu0 %v1863
    %v2014 = vpop.f32.mrb[0].mxu0
    %v2015 = vadd.f32 %v1898, %v2014
    %v2016 = vpop.f32.mrb[0].mxu0
    %v2017 = vpop.f32.mrb[0].mxu0
    %v2018 = vadd.f32 %v1898, %v2017
    %v2019 = vpop.f32.mrb[0].mxu0
    %2020 = vmatprep.mubr.bf16.mxu0 0
    %2021 = vmatmul.mubr.bf16.gmra.mrb[0].mxu0 %v1864
    %v2022 = vpop.f32.mrb[0].mxu0
    %v2023 = vadd.f32 %v1898, %v2022
    %v2024 = vpop.f32.mrb[0].mxu0
    %v2025 = vpop.f32.mrb[0].mxu0
    %v2026 = vadd.f32 %v1898, %v2025
    %v2027 = vpop.f32.mrb[0].mxu0
    %2028 = vmatprep.mubr.bf16.mxu0 0
    %2029 = vmatmul.mubr.bf16.gmra.mrb[0].mxu0 %v1865
    %v2030 = vpop.f32.mrb[0].mxu0
    %v2031 = vadd.f32 %v1898, %v2030
    %v2032 = vpop.f32.mrb[0].mxu0
    %v2033 = vpop.f32.mrb[0].mxu0
    %v2034 = vadd.f32 %v1898, %v2033
    %v2035 = vpop.f32.mrb[0].mxu0
    %2036 = vmatprep.mubr.bf16.mxu0 0
    %2037 = vmatmul.mubr.bf16.gmra.mrb[0].mxu0 %v1866
    %v2038 = vpop.f32.mrb[0].mxu0
    %v2039 = vadd.f32 %v1898, %v2038
    %v2040 = vpop.f32.mrb[0].mxu0
    %v2041 = vpop.f32.mrb[0].mxu0
    %v2042 = vadd.f32 %v1898, %v2041
    %v2043 = vpop.f32.mrb[0].mxu0
    %2044 = vmatprep.mubr.bf16.mxu0 0
    %2045 = vmatmul.mubr.bf16.gmra.mrb[0].mxu0 %v1867
    %v2046 = vpop.f32.mrb[0].mxu0
    %v2047 = vadd.f32 %v1898, %v2046
    %v2048 = vpop.f32.mrb[0].mxu0
    %v2049 = vpop.f32.mrb[0].mxu0
    %v2050 = vadd.f32 %v1898, %v2049
    %v2051 = vpop.f32.mrb[0].mxu0
    %2052 = vmatprep.mubr.bf16.mxu0 0
    %2053 = vmatmul.mubr.bf16.gmra.mrb[0].mxu0 %v1868
    %v2054 = vpop.f32.mrb[0].mxu0
    %v2055 = vadd.f32 %v1898, %v2054
    %v2056 = vpop.f32.mrb[0].mxu0
    %v2057 = vpop.f32.mrb[0].mxu0
    %v2058 = vadd.f32 %v1898, %v2057
    %v2059 = vpop.f32.mrb[0].mxu0
    %2060 = vmatprep.mubr.bf16.mxu0 0
    %2061 = vmatmul.mubr.bf16.gmra.mrb[0].mxu0 %v1869
    %v2062 = vpop.f32.mrb[0].mxu0
    %v2063 = vadd.f32 %v1898, %v2062
    %v2064 = vpop.f32.mrb[0].mxu0
    %v2065 = vpop.f32.mrb[0].mxu0
    %v2066 = vadd.f32 %v1898, %v2065
    %v2067 = vpop.f32.mrb[0].mxu0
    %2068 = vmatprep.mubr.bf16.mxu0 0
    %2069 = vmatmul.mubr.bf16.gmra.mrb[0].mxu0 %v1870
    %v2070 = vpop.f32.mrb[0].mxu0
    %v2071 = vadd.f32 %v1898, %v2070
    %v2072 = vpop.f32.mrb[0].mxu0
    %v2073 = vpop.f32.mrb[0].mxu0
    %v2074 = vadd.f32 %v1898, %v2073
    %v2075 = vpop.f32.mrb[0].mxu0
    %2076 = vmatprep.mubr.bf16.mxu0 0
    %2077 = vmatmul.mubr.bf16.gmra.mrb[0].mxu0 %v1871
    %v2078 = vpop.f32.mrb[0].mxu0
    %v2079 = vadd.f32 %v1898, %v2078
    %v2080 = vpop.f32.mrb[0].mxu0
    %v2081 = vpop.f32.mrb[0].mxu0
    %v2082 = vadd.f32 %v1898, %v2081
    %v2083 = vpop.f32.mrb[0].mxu0
    %2084 = vmatprep.mubr.bf16.mxu0 0
    %2085 = vmatmul.mubr.bf16.gmra.mrb[0].mxu0 %v1872
    %v2086 = vpop.f32.mrb[0].mxu0
    %v2087 = vadd.f32 %v1898, %v2086
    %v2088 = vpop.f32.mrb[0].mxu0
    %v2089 = vpop.f32.mrb[0].mxu0
    %v2090 = vadd.f32 %v1898, %v2089
    %v2091 = vpop.f32.mrb[0].mxu0
    %2092 = vmatprep.mubr.bf16.mxu0 0
    %2093 = vmatmul.mubr.bf16.gmra.mrb[0].mxu0 %v1873
    %v2094 = vpop.f32.mrb[0].mxu0
    %v2095 = vadd.f32 %v1898, %v2094
    %v2096 = vpop.f32.mrb[0].mxu0
    %v2097 = vpop.f32.mrb[0].mxu0
    %v2098 = vadd.f32 %v1898, %v2097
    %v2099 = vpop.f32.mrb[0].mxu0
    %2100 = vmatprep.mubr.bf16.mxu0 0
    %2101 = vmatmul.mubr.bf16.gmra.mrb[0].mxu0 %v1874
    %v2102 = vpop.f32.mrb[0].mxu0
    %v2103 = vadd.f32 %v1898, %v2102
    %v2104 = vpop.f32.mrb[0].mxu0
    %v2105 = vpop.f32.mrb[0].mxu0
    %v2106 = vadd.f32 %v1898, %v2105
    %v2107 = vpop.f32.mrb[0].mxu0
    %2108 = vdwg.mxu0
    %v2109 = vmax.f32 %v1983, 0.0
    %v2110 = vmax.f32 %v1986, 0.0
    %v2111 = vmax.f32 %v1991, 0.0
    %v2112 = vmax.f32 %v1994, 0.0
    %v2113 = vmax.f32 %v1999, 0.0
    %v2114 = vmax.f32 %v2002, 0.0
    %v2115 = vmax.f32 %v2007, 0.0
    %v2116 = vmax.f32 %v2010, 0.0
    %v2117 = vmax.f32 %v2015, 0.0
    %v2118 = vmax.f32 %v2018, 0.0
    %v2119 = vmax.f32 %v2023, 0.0
    %v2120 = vmax.f32 %v2026, 0.0
    %v2121 = vmax.f32 %v2031, 0.0
    %v2122 = vmax.f32 %v2034, 0.0
    %v2123 = vmax.f32 %v2039, 0.0
    %v2124 = vmax.f32 %v2042, 0.0
    %v2125 = vmax.f32 %v2047, 0.0
    %v2126 = vmax.f32 %v2050, 0.0
    %v2127 = vmax.f32 %v2055, 0.0
    %v2128 = vmax.f32 %v2058, 0.0
    %v2129 = vmax.f32 %v2063, 0.0
    %v2130 = vmax.f32 %v2066, 0.0
    %v2131 = vmax.f32 %v2071, 0.0
    %v2132 = vmax.f32 %v2074, 0.0
    %v2133 = vmax.f32 %v2079, 0.0
    %v2134 = vmax.f32 %v2082, 0.0
    %v2135 = vmax.f32 %v2087, 0.0
    %v2136 = vmax.f32 %v2090, 0.0
    %v2137 = vmax.f32 %v2095, 0.0
    %v2138 = vmax.f32 %v2098, 0.0
    %v2139 = vmax.f32 %v2103, 0.0
    %v2140 = vmax.f32 %v2106, 0.0
    %v2141 = vpack.c.bf16 %v2110, %v2109
    %v2142 = vpack.c.bf16 %v2112, %v2111
    %v2143 = vpack.c.bf16 %v2114, %v2113
    %v2144 = vpack.c.bf16 %v2116, %v2115
    %v2145 = vpack.c.bf16 %v2118, %v2117
    %v2146 = vpack.c.bf16 %v2120, %v2119
    %v2147 = vpack.c.bf16 %v2122, %v2121
    %v2148 = vpack.c.bf16 %v2124, %v2123
    %v2149 = vpack.c.bf16 %v2126, %v2125
    %v2150 = vpack.c.bf16 %v2128, %v2127
    %v2151 = vpack.c.bf16 %v2130, %v2129
    %v2152 = vpack.c.bf16 %v2132, %v2131
    %v2153 = vpack.c.bf16 %v2134, %v2133
    %v2154 = vpack.c.bf16 %v2136, %v2135
    %v2155 = vpack.c.bf16 %v2138, %v2137
    %v2156 = vpack.c.bf16 %v2140, %v2139
    %s2157 = scalar_lea.vmem [#allocation2], 320
    %v2158 = vld [vmem:[%s2157] sm:$0xf]
    %v2159 = vld [vmem:[%s2157 + $0x4] sm:$0xf]
    %v2160 = vld [vmem:[%s2157 + $0x8] sm:$0xf]
    %v2161 = vld [vmem:[%s2157 + $0xc] sm:$0xf]
    %v2162 = vld [vmem:[%s2157 + $0x10] sm:$0xf]
    %v2163 = vld [vmem:[%s2157 + $0x14] sm:$0xf]
    %v2164 = vld [vmem:[%s2157 + $0x18] sm:$0xf]
    %v2165 = vld [vmem:[%s2157 + $0x1c] sm:$0xf]
    %v2166 = vld [vmem:[%s2157 + $0x20] sm:$0xf]
    %v2167 = vld [vmem:[%s2157 + $0x24] sm:$0xf]
    %v2168 = vld [vmem:[%s2157 + $0x28] sm:$0xf]
    %v2169 = vld [vmem:[%s2157 + $0x2c] sm:$0xf]
    %v2170 = vld [vmem:[%s2157 + $0x30] sm:$0xf]
    %v2171 = vld [vmem:[%s2157 + $0x34] sm:$0xf]
    %v2172 = vld [vmem:[%s2157 + $0x38] sm:$0xf]
    %v2173 = vld [vmem:[%s2157 + $0x3c] sm:$0xf]
    %s2174 = scalar_lea.vmem %s4, 5
    %v2175 = vld [vmem:[%s2174] sm:$0x1]
    %v2177 = vlaneseq
    %v2178 = vshrl.u32 %v2177, 7
    %v2179 = vsub.s32 0, %v2178
    %v2180 = vrot.slane %v2175, %v2179
    %v2198 = vunpack.c.l.b16 %v2158
    %v2199 = vunpack.c.l.b16 %v2159
    %v2200 = vunpack.c.l.b16 %v2160
    %v2201 = vunpack.c.l.b16 %v2161
    %v2202 = vunpack.c.l.b16 %v2162
    %v2203 = vunpack.c.l.b16 %v2163
    %v2204 = vunpack.c.l.b16 %v2164
    %v2205 = vunpack.c.l.b16 %v2165
    %v2206 = vunpack.c.l.b16 %v2166
    %v2207 = vunpack.c.l.b16 %v2167
    %v2208 = vunpack.c.l.b16 %v2168
    %v2209 = vunpack.c.l.b16 %v2169
    %v2210 = vunpack.c.l.b16 %v2170
    %v2211 = vunpack.c.l.b16 %v2171
    %v2212 = vunpack.c.l.b16 %v2172
    %v2213 = vunpack.c.l.b16 %v2173
    %v2214 = vpack.c.b16 %v2199, %v2198
    %v2215 = vpack.c.b16 %v2201, %v2200
    %v2216 = vpack.c.b16 %v2203, %v2202
    %v2217 = vpack.c.b16 %v2205, %v2204
    %v2218 = vpack.c.b16 %v2207, %v2206
    %v2219 = vpack.c.b16 %v2209, %v2208
    %v2220 = vpack.c.b16 %v2211, %v2210
    %v2221 = vpack.c.b16 %v2213, %v2212
    %2230 = vmatprep.subr.bf16.mxu0 0
    %2231 = vmatpush1.bf16.msra.mxu0 %v2214
    %2232 = vmatprep.subr.bf16.mxu0 0
    %2233 = vmatpush1.bf16.msra.mxu0 %v2215
    %2234 = vmatprep.subr.bf16.mxu0 0
    %2235 = vmatpush1.bf16.msra.mxu0 %v2216
    %2236 = vmatprep.subr.bf16.mxu0 0
    %2237 = vmatpush1.bf16.msra.mxu0 %v2217
    %2238 = vmatprep.subr.bf16.mxu0 0
    %2239 = vmatpush1.bf16.msra.mxu0 %v2218
    %2240 = vmatprep.subr.bf16.mxu0 0
    %2241 = vmatpush1.bf16.msra.mxu0 %v2219
    %2242 = vmatprep.subr.bf16.mxu0 0
    %2243 = vmatpush1.bf16.msra.mxu0 %v2220
    %2244 = vmatprep.subr.bf16.mxu0 0
    %2245 = vmatpush1.bf16.msra.mxu0 %v2221
    %2246 = vmatprep.subr.bf16.mxu0 0
    %2247 = vmatpush1.bf16.msra.mxu0 0
    %2248 = vmatprep.subr.bf16.mxu0 0
    %2249 = vmatpush1.bf16.msra.mxu0 0
    %2250 = vmatprep.subr.bf16.mxu0 0
    %2251 = vmatpush1.bf16.msra.mxu0 0
    %2252 = vmatprep.subr.bf16.mxu0 0
    %2253 = vmatpush1.bf16.msra.mxu0 0
    %2254 = vmatprep.subr.bf16.mxu0 0
    %2255 = vmatpush1.bf16.msra.mxu0 0
    %2256 = vmatprep.subr.bf16.mxu0 0
    %2257 = vmatpush1.bf16.msra.mxu0 0
    %2258 = vmatprep.subr.bf16.mxu0 0
    %2259 = vmatpush1.bf16.msra.mxu0 0
    %2260 = vmatprep.subr.bf16.mxu0 0
    %2261 = vmatpush1.bf16.msra.mxu0 0
    %2262 = vmatprep.mubr.bf16.mxu0 0
    %2263 = vmatmul.mubr.bf16.gmra.mrb[0].mxu0 %v2141
    %v2264 = vpop.f32.mrb[0].mxu0
    %v2265 = vadd.f32 %v2180, %v2264
    %v2266 = vpop.f32.mrb[0].mxu0
    %v2267 = vpop.f32.mrb[0].mxu0
    %v2268 = vadd.f32 %v2180, %v2267
    %v2269 = vpop.f32.mrb[0].mxu0
    %2270 = vmatprep.mubr.bf16.mxu0 0
    %2271 = vmatmul.mubr.bf16.gmra.mrb[0].mxu0 %v2142
    %v2272 = vpop.f32.mrb[0].mxu0
    %v2273 = vadd.f32 %v2180, %v2272
    %v2274 = vpop.f32.mrb[0].mxu0
    %v2275 = vpop.f32.mrb[0].mxu0
    %v2276 = vadd.f32 %v2180, %v2275
    %v2277 = vpop.f32.mrb[0].mxu0
    %2278 = vmatprep.mubr.bf16.mxu0 0
    %2279 = vmatmul.mubr.bf16.gmra.mrb[0].mxu0 %v2143
    %v2280 = vpop.f32.mrb[0].mxu0
    %v2281 = vadd.f32 %v2180, %v2280
    %v2282 = vpop.f32.mrb[0].mxu0
    %v2283 = vpop.f32.mrb[0].mxu0
    %v2284 = vadd.f32 %v2180, %v2283
    %v2285 = vpop.f32.mrb[0].mxu0
    %2286 = vmatprep.mubr.bf16.mxu0 0
    %2287 = vmatmul.mubr.bf16.gmra.mrb[0].mxu0 %v2144
    %v2288 = vpop.f32.mrb[0].mxu0
    %v2289 = vadd.f32 %v2180, %v2288
    %v2290 = vpop.f32.mrb[0].mxu0
    %v2291 = vpop.f32.mrb[0].mxu0
    %v2292 = vadd.f32 %v2180, %v2291
    %v2293 = vpop.f32.mrb[0].mxu0
    %2294 = vmatprep.mubr.bf16.mxu0 0
    %2295 = vmatmul.mubr.bf16.gmra.mrb[0].mxu0 %v2145
    %v2296 = vpop.f32.mrb[0].mxu0
    %v2297 = vadd.f32 %v2180, %v2296
    %v2298 = vpop.f32.mrb[0].mxu0
    %v2299 = vpop.f32.mrb[0].mxu0
    %v2300 = vadd.f32 %v2180, %v2299
    %v2301 = vpop.f32.mrb[0].mxu0
    %2302 = vmatprep.mubr.bf16.mxu0 0
    %2303 = vmatmul.mubr.bf16.gmra.mrb[0].mxu0 %v2146
    %v2304 = vpop.f32.mrb[0].mxu0
    %v2305 = vadd.f32 %v2180, %v2304
    %v2306 = vpop.f32.mrb[0].mxu0
    %v2307 = vpop.f32.mrb[0].mxu0
    %v2308 = vadd.f32 %v2180, %v2307
    %v2309 = vpop.f32.mrb[0].mxu0
    %2310 = vmatprep.mubr.bf16.mxu0 0
    %2311 = vmatmul.mubr.bf16.gmra.mrb[0].mxu0 %v2147
    %v2312 = vpop.f32.mrb[0].mxu0
    %v2313 = vadd.f32 %v2180, %v2312
    %v2314 = vpop.f32.mrb[0].mxu0
    %v2315 = vpop.f32.mrb[0].mxu0
    %v2316 = vadd.f32 %v2180, %v2315
    %v2317 = vpop.f32.mrb[0].mxu0
    %2318 = vmatprep.mubr.bf16.mxu0 0
    %2319 = vmatmul.mubr.bf16.gmra.mrb[0].mxu0 %v2148
    %v2320 = vpop.f32.mrb[0].mxu0
    %v2321 = vadd.f32 %v2180, %v2320
    %v2322 = vpop.f32.mrb[0].mxu0
    %v2323 = vpop.f32.mrb[0].mxu0
    %v2324 = vadd.f32 %v2180, %v2323
    %v2325 = vpop.f32.mrb[0].mxu0
    %2326 = vmatprep.mubr.bf16.mxu0 0
    %2327 = vmatmul.mubr.bf16.gmra.mrb[0].mxu0 %v2149
    %v2328 = vpop.f32.mrb[0].mxu0
    %v2329 = vadd.f32 %v2180, %v2328
    %v2330 = vpop.f32.mrb[0].mxu0
    %v2331 = vpop.f32.mrb[0].mxu0
    %v2332 = vadd.f32 %v2180, %v2331
    %v2333 = vpop.f32.mrb[0].mxu0
    %2334 = vmatprep.mubr.bf16.mxu0 0
    %2335 = vmatmul.mubr.bf16.gmra.mrb[0].mxu0 %v2150
    %v2336 = vpop.f32.mrb[0].mxu0
    %v2337 = vadd.f32 %v2180, %v2336
    %v2338 = vpop.f32.mrb[0].mxu0
    %v2339 = vpop.f32.mrb[0].mxu0
    %v2340 = vadd.f32 %v2180, %v2339
    %v2341 = vpop.f32.mrb[0].mxu0
    %2342 = vmatprep.mubr.bf16.mxu0 0
    %2343 = vmatmul.mubr.bf16.gmra.mrb[0].mxu0 %v2151
    %v2344 = vpop.f32.mrb[0].mxu0
    %v2345 = vadd.f32 %v2180, %v2344
    %v2346 = vpop.f32.mrb[0].mxu0
    %v2347 = vpop.f32.mrb[0].mxu0
    %v2348 = vadd.f32 %v2180, %v2347
    %v2349 = vpop.f32.mrb[0].mxu0
    %2350 = vmatprep.mubr.bf16.mxu0 0
    %2351 = vmatmul.mubr.bf16.gmra.mrb[0].mxu0 %v2152
    %v2352 = vpop.f32.mrb[0].mxu0
    %v2353 = vadd.f32 %v2180, %v2352
    %v2354 = vpop.f32.mrb[0].mxu0
    %v2355 = vpop.f32.mrb[0].mxu0
    %v2356 = vadd.f32 %v2180, %v2355
    %v2357 = vpop.f32.mrb[0].mxu0
    %2358 = vmatprep.mubr.bf16.mxu0 0
    %2359 = vmatmul.mubr.bf16.gmra.mrb[0].mxu0 %v2153
    %v2360 = vpop.f32.mrb[0].mxu0
    %v2361 = vadd.f32 %v2180, %v2360
    %v2362 = vpop.f32.mrb[0].mxu0
    %v2363 = vpop.f32.mrb[0].mxu0
    %v2364 = vadd.f32 %v2180, %v2363
    %v2365 = vpop.f32.mrb[0].mxu0
    %2366 = vmatprep.mubr.bf16.mxu0 0
    %2367 = vmatmul.mubr.bf16.gmra.mrb[0].mxu0 %v2154
    %v2368 = vpop.f32.mrb[0].mxu0
    %v2369 = vadd.f32 %v2180, %v2368
    %v2370 = vpop.f32.mrb[0].mxu0
    %v2371 = vpop.f32.mrb[0].mxu0
    %v2372 = vadd.f32 %v2180, %v2371
    %v2373 = vpop.f32.mrb[0].mxu0
    %2374 = vmatprep.mubr.bf16.mxu0 0
    %2375 = vmatmul.mubr.bf16.gmra.mrb[0].mxu0 %v2155
    %v2376 = vpop.f32.mrb[0].mxu0
    %v2377 = vadd.f32 %v2180, %v2376
    %v2378 = vpop.f32.mrb[0].mxu0
    %v2379 = vpop.f32.mrb[0].mxu0
    %v2380 = vadd.f32 %v2180, %v2379
    %v2381 = vpop.f32.mrb[0].mxu0
    %2382 = vmatprep.mubr.bf16.mxu0 0
    %2383 = vmatmul.mubr.bf16.gmra.mrb[0].mxu0 %v2156
    %v2384 = vpop.f32.mrb[0].mxu0
    %v2385 = vadd.f32 %v2180, %v2384
    %v2386 = vpop.f32.mrb[0].mxu0
    %v2387 = vpop.f32.mrb[0].mxu0
    %v2388 = vadd.f32 %v2180, %v2387
    %v2389 = vpop.f32.mrb[0].mxu0
    %2390 = vdwg.mxu0
    %v2391 = vmax.f32 %v2265, 0.0
    %v2392 = vmax.f32 %v2268, 0.0
    %v2393 = vmax.f32 %v2273, 0.0
    %v2394 = vmax.f32 %v2276, 0.0
    %v2395 = vmax.f32 %v2281, 0.0
    %v2396 = vmax.f32 %v2284, 0.0
    %v2397 = vmax.f32 %v2289, 0.0
    %v2398 = vmax.f32 %v2292, 0.0
    %v2399 = vmax.f32 %v2297, 0.0
    %v2400 = vmax.f32 %v2300, 0.0
    %v2401 = vmax.f32 %v2305, 0.0
    %v2402 = vmax.f32 %v2308, 0.0
    %v2403 = vmax.f32 %v2313, 0.0
    %v2404 = vmax.f32 %v2316, 0.0
    %v2405 = vmax.f32 %v2321, 0.0
    %v2406 = vmax.f32 %v2324, 0.0
    %v2407 = vmax.f32 %v2329, 0.0
    %v2408 = vmax.f32 %v2332, 0.0
    %v2409 = vmax.f32 %v2337, 0.0
    %v2410 = vmax.f32 %v2340, 0.0
    %v2411 = vmax.f32 %v2345, 0.0
    %v2412 = vmax.f32 %v2348, 0.0
    %v2413 = vmax.f32 %v2353, 0.0
    %v2414 = vmax.f32 %v2356, 0.0
    %v2415 = vmax.f32 %v2361, 0.0
    %v2416 = vmax.f32 %v2364, 0.0
    %v2417 = vmax.f32 %v2369, 0.0
    %v2418 = vmax.f32 %v2372, 0.0
    %v2419 = vmax.f32 %v2377, 0.0
    %v2420 = vmax.f32 %v2380, 0.0
    %v2421 = vmax.f32 %v2385, 0.0
    %v2422 = vmax.f32 %v2388, 0.0
    %v2423 = vpack.c.bf16 %v2392, %v2391
    %v2424 = vpack.c.bf16 %v2394, %v2393
    %v2425 = vpack.c.bf16 %v2396, %v2395
    %v2426 = vpack.c.bf16 %v2398, %v2397
    %v2427 = vpack.c.bf16 %v2400, %v2399
    %v2428 = vpack.c.bf16 %v2402, %v2401
    %v2429 = vpack.c.bf16 %v2404, %v2403
    %v2430 = vpack.c.bf16 %v2406, %v2405
    %v2431 = vpack.c.bf16 %v2408, %v2407
    %v2432 = vpack.c.bf16 %v2410, %v2409
    %v2433 = vpack.c.bf16 %v2412, %v2411
    %v2434 = vpack.c.bf16 %v2414, %v2413
    %v2435 = vpack.c.bf16 %v2416, %v2415
    %v2436 = vpack.c.bf16 %v2418, %v2417
    %v2437 = vpack.c.bf16 %v2420, %v2419
    %v2438 = vpack.c.bf16 %v2422, %v2421
    %s2439 = scalar_lea.vmem [#allocation2], 384
    %v2440 = vld [vmem:[%s2439] sm:$0xf]
    %v2441 = vld [vmem:[%s2439 + $0x4] sm:$0xf]
    %v2442 = vld [vmem:[%s2439 + $0x8] sm:$0xf]
    %v2443 = vld [vmem:[%s2439 + $0xc] sm:$0xf]
    %v2444 = vld [vmem:[%s2439 + $0x10] sm:$0xf]
    %v2445 = vld [vmem:[%s2439 + $0x14] sm:$0xf]
    %v2446 = vld [vmem:[%s2439 + $0x18] sm:$0xf]
    %v2447 = vld [vmem:[%s2439 + $0x1c] sm:$0xf]
    %v2448 = vld [vmem:[%s2439 + $0x20] sm:$0xf]
    %v2449 = vld [vmem:[%s2439 + $0x24] sm:$0xf]
    %v2450 = vld [vmem:[%s2439 + $0x28] sm:$0xf]
    %v2451 = vld [vmem:[%s2439 + $0x2c] sm:$0xf]
    %v2452 = vld [vmem:[%s2439 + $0x30] sm:$0xf]
    %v2453 = vld [vmem:[%s2439 + $0x34] sm:$0xf]
    %v2454 = vld [vmem:[%s2439 + $0x38] sm:$0xf]
    %v2455 = vld [vmem:[%s2439 + $0x3c] sm:$0xf]
    %s2456 = scalar_lea.vmem %s4, 6
    %v2457 = vld [vmem:[%s2456] sm:$0x1]
    %v2459 = vlaneseq
    %v2460 = vshrl.u32 %v2459, 7
    %v2461 = vsub.s32 0, %v2460
    %v2462 = vrot.slane %v2457, %v2461
    %v2480 = vunpack.c.l.b16 %v2440
    %v2481 = vunpack.c.l.b16 %v2441
    %v2482 = vunpack.c.l.b16 %v2442
    %v2483 = vunpack.c.l.b16 %v2443
    %v2484 = vunpack.c.l.b16 %v2444
    %v2485 = vunpack.c.l.b16 %v2445
    %v2486 = vunpack.c.l.b16 %v2446
    %v2487 = vunpack.c.l.b16 %v2447
    %v2488 = vunpack.c.l.b16 %v2448
    %v2489 = vunpack.c.l.b16 %v2449
    %v2490 = vunpack.c.l.b16 %v2450
    %v2491 = vunpack.c.l.b16 %v2451
    %v2492 = vunpack.c.l.b16 %v2452
    %v2493 = vunpack.c.l.b16 %v2453
    %v2494 = vunpack.c.l.b16 %v2454
    %v2495 = vunpack.c.l.b16 %v2455
    %v2496 = vpack.c.b16 %v2481, %v2480
    %v2497 = vpack.c.b16 %v2483, %v2482
    %v2498 = vpack.c.b16 %v2485, %v2484
    %v2499 = vpack.c.b16 %v2487, %v2486
    %v2500 = vpack.c.b16 %v2489, %v2488
    %v2501 = vpack.c.b16 %v2491, %v2490
    %v2502 = vpack.c.b16 %v2493, %v2492
    %v2503 = vpack.c.b16 %v2495, %v2494
    %2512 = vmatprep.subr.bf16.mxu0 0
    %2513 = vmatpush1.bf16.msra.mxu0 %v2496
    %2514 = vmatprep.subr.bf16.mxu0 0
    %2515 = vmatpush1.bf16.msra.mxu0 %v2497
    %2516 = vmatprep.subr.bf16.mxu0 0
    %2517 = vmatpush1.bf16.msra.mxu0 %v2498
    %2518 = vmatprep.subr.bf16.mxu0 0
    %2519 = vmatpush1.bf16.msra.mxu0 %v2499
    %2520 = vmatprep.subr.bf16.mxu0 0
    %2521 = vmatpush1.bf16.msra.mxu0 %v2500
    %2522 = vmatprep.subr.bf16.mxu0 0
    %2523 = vmatpush1.bf16.msra.mxu0 %v2501
    %2524 = vmatprep.subr.bf16.mxu0 0
    %2525 = vmatpush1.bf16.msra.mxu0 %v2502
    %2526 = vmatprep.subr.bf16.mxu0 0
    %2527 = vmatpush1.bf16.msra.mxu0 %v2503
    %2528 = vmatprep.subr.bf16.mxu0 0
    %2529 = vmatpush1.bf16.msra.mxu0 0
    %2530 = vmatprep.subr.bf16.mxu0 0
    %2531 = vmatpush1.bf16.msra.mxu0 0
    %2532 = vmatprep.subr.bf16.mxu0 0
    %2533 = vmatpush1.bf16.msra.mxu0 0
    %2534 = vmatprep.subr.bf16.mxu0 0
    %2535 = vmatpush1.bf16.msra.mxu0 0
    %2536 = vmatprep.subr.bf16.mxu0 0
    %2537 = vmatpush1.bf16.msra.mxu0 0
    %2538 = vmatprep.subr.bf16.mxu0 0
    %2539 = vmatpush1.bf16.msra.mxu0 0
    %2540 = vmatprep.subr.bf16.mxu0 0
    %2541 = vmatpush1.bf16.msra.mxu0 0
    %2542 = vmatprep.subr.bf16.mxu0 0
    %2543 = vmatpush1.bf16.msra.mxu0 0
    %2544 = vmatprep.mubr.bf16.mxu0 0
    %2545 = vmatmul.mubr.bf16.gmra.mrb[0].mxu0 %v2423
    %v2546 = vpop.f32.mrb[0].mxu0
    %v2547 = vadd.f32 %v2462, %v2546
    %v2548 = vpop.f32.mrb[0].mxu0
    %v2549 = vpop.f32.mrb[0].mxu0
    %v2550 = vadd.f32 %v2462, %v2549
    %v2551 = vpop.f32.mrb[0].mxu0
    %2552 = vmatprep.mubr.bf16.mxu0 0
    %2553 = vmatmul.mubr.bf16.gmra.mrb[0].mxu0 %v2424
    %v2554 = vpop.f32.mrb[0].mxu0
    %v2555 = vadd.f32 %v2462, %v2554
    %v2556 = vpop.f32.mrb[0].mxu0
    %v2557 = vpop.f32.mrb[0].mxu0
    %v2558 = vadd.f32 %v2462, %v2557
    %v2559 = vpop.f32.mrb[0].mxu0
    %2560 = vmatprep.mubr.bf16.mxu0 0
    %2561 = vmatmul.mubr.bf16.gmra.mrb[0].mxu0 %v2425
    %v2562 = vpop.f32.mrb[0].mxu0
    %v2563 = vadd.f32 %v2462, %v2562
    %v2564 = vpop.f32.mrb[0].mxu0
    %v2565 = vpop.f32.mrb[0].mxu0
    %v2566 = vadd.f32 %v2462, %v2565
    %v2567 = vpop.f32.mrb[0].mxu0
    %2568 = vmatprep.mubr.bf16.mxu0 0
    %2569 = vmatmul.mubr.bf16.gmra.mrb[0].mxu0 %v2426
    %v2570 = vpop.f32.mrb[0].mxu0
    %v2571 = vadd.f32 %v2462, %v2570
    %v2572 = vpop.f32.mrb[0].mxu0
    %v2573 = vpop.f32.mrb[0].mxu0
    %v2574 = vadd.f32 %v2462, %v2573
    %v2575 = vpop.f32.mrb[0].mxu0
    %2576 = vmatprep.mubr.bf16.mxu0 0
    %2577 = vmatmul.mubr.bf16.gmra.mrb[0].mxu0 %v2427
    %v2578 = vpop.f32.mrb[0].mxu0
    %v2579 = vadd.f32 %v2462, %v2578
    %v2580 = vpop.f32.mrb[0].mxu0
    %v2581 = vpop.f32.mrb[0].mxu0
    %v2582 = vadd.f32 %v2462, %v2581
    %v2583 = vpop.f32.mrb[0].mxu0
    %2584 = vmatprep.mubr.bf16.mxu0 0
    %2585 = vmatmul.mubr.bf16.gmra.mrb[0].mxu0 %v2428
    %v2586 = vpop.f32.mrb[0].mxu0
    %v2587 = vadd.f32 %v2462, %v2586
    %v2588 = vpop.f32.mrb[0].mxu0
    %v2589 = vpop.f32.mrb[0].mxu0
    %v2590 = vadd.f32 %v2462, %v2589
    %v2591 = vpop.f32.mrb[0].mxu0
    %2592 = vmatprep.mubr.bf16.mxu0 0
    %2593 = vmatmul.mubr.bf16.gmra.mrb[0].mxu0 %v2429
    %v2594 = vpop.f32.mrb[0].mxu0
    %v2595 = vadd.f32 %v2462, %v2594
    %v2596 = vpop.f32.mrb[0].mxu0
    %v2597 = vpop.f32.mrb[0].mxu0
    %v2598 = vadd.f32 %v2462, %v2597
    %v2599 = vpop.f32.mrb[0].mxu0
    %2600 = vmatprep.mubr.bf16.mxu0 0
    %2601 = vmatmul.mubr.bf16.gmra.mrb[0].mxu0 %v2430
    %v2602 = vpop.f32.mrb[0].mxu0
    %v2603 = vadd.f32 %v2462, %v2602
    %v2604 = vpop.f32.mrb[0].mxu0
    %v2605 = vpop.f32.mrb[0].mxu0
    %v2606 = vadd.f32 %v2462, %v2605
    %v2607 = vpop.f32.mrb[0].mxu0
    %2608 = vmatprep.mubr.bf16.mxu0 0
    %2609 = vmatmul.mubr.bf16.gmra.mrb[0].mxu0 %v2431
    %v2610 = vpop.f32.mrb[0].mxu0
    %v2611 = vadd.f32 %v2462, %v2610
    %v2612 = vpop.f32.mrb[0].mxu0
    %v2613 = vpop.f32.mrb[0].mxu0
    %v2614 = vadd.f32 %v2462, %v2613
    %v2615 = vpop.f32.mrb[0].mxu0
    %2616 = vmatprep.mubr.bf16.mxu0 0
    %2617 = vmatmul.mubr.bf16.gmra.mrb[0].mxu0 %v2432
    %v2618 = vpop.f32.mrb[0].mxu0
    %v2619 = vadd.f32 %v2462, %v2618
    %v2620 = vpop.f32.mrb[0].mxu0
    %v2621 = vpop.f32.mrb[0].mxu0
    %v2622 = vadd.f32 %v2462, %v2621
    %v2623 = vpop.f32.mrb[0].mxu0
    %2624 = vmatprep.mubr.bf16.mxu0 0
    %2625 = vmatmul.mubr.bf16.gmra.mrb[0].mxu0 %v2433
    %v2626 = vpop.f32.mrb[0].mxu0
    %v2627 = vadd.f32 %v2462, %v2626
    %v2628 = vpop.f32.mrb[0].mxu0
    %v2629 = vpop.f32.mrb[0].mxu0
    %v2630 = vadd.f32 %v2462, %v2629
    %v2631 = vpop.f32.mrb[0].mxu0
    %2632 = vmatprep.mubr.bf16.mxu0 0
    %2633 = vmatmul.mubr.bf16.gmra.mrb[0].mxu0 %v2434
    %v2634 = vpop.f32.mrb[0].mxu0
    %v2635 = vadd.f32 %v2462, %v2634
    %v2636 = vpop.f32.mrb[0].mxu0
    %v2637 = vpop.f32.mrb[0].mxu0
    %v2638 = vadd.f32 %v2462, %v2637
    %v2639 = vpop.f32.mrb[0].mxu0
    %2640 = vmatprep.mubr.bf16.mxu0 0
    %2641 = vmatmul.mubr.bf16.gmra.mrb[0].mxu0 %v2435
    %v2642 = vpop.f32.mrb[0].mxu0
    %v2643 = vadd.f32 %v2462, %v2642
    %v2644 = vpop.f32.mrb[0].mxu0
    %v2645 = vpop.f32.mrb[0].mxu0
    %v2646 = vadd.f32 %v2462, %v2645
    %v2647 = vpop.f32.mrb[0].mxu0
    %2648 = vmatprep.mubr.bf16.mxu0 0
    %2649 = vmatmul.mubr.bf16.gmra.mrb[0].mxu0 %v2436
    %v2650 = vpop.f32.mrb[0].mxu0
    %v2651 = vadd.f32 %v2462, %v2650
    %v2652 = vpop.f32.mrb[0].mxu0
    %v2653 = vpop.f32.mrb[0].mxu0
    %v2654 = vadd.f32 %v2462, %v2653
    %v2655 = vpop.f32.mrb[0].mxu0
    %2656 = vmatprep.mubr.bf16.mxu0 0
    %2657 = vmatmul.mubr.bf16.gmra.mrb[0].mxu0 %v2437
    %v2658 = vpop.f32.mrb[0].mxu0
    %v2659 = vadd.f32 %v2462, %v2658
    %v2660 = vpop.f32.mrb[0].mxu0
    %v2661 = vpop.f32.mrb[0].mxu0
    %v2662 = vadd.f32 %v2462, %v2661
    %v2663 = vpop.f32.mrb[0].mxu0
    %2664 = vmatprep.mubr.bf16.mxu0 0
    %2665 = vmatmul.mubr.bf16.gmra.mrb[0].mxu0 %v2438
    %v2666 = vpop.f32.mrb[0].mxu0
    %v2667 = vadd.f32 %v2462, %v2666
    %v2668 = vpop.f32.mrb[0].mxu0
    %v2669 = vpop.f32.mrb[0].mxu0
    %v2670 = vadd.f32 %v2462, %v2669
    %v2671 = vpop.f32.mrb[0].mxu0
    %2672 = vdwg.mxu0
    %v2673 = vmax.f32 %v2547, 0.0
    %v2674 = vmax.f32 %v2550, 0.0
    %v2675 = vmax.f32 %v2555, 0.0
    %v2676 = vmax.f32 %v2558, 0.0
    %v2677 = vmax.f32 %v2563, 0.0
    %v2678 = vmax.f32 %v2566, 0.0
    %v2679 = vmax.f32 %v2571, 0.0
    %v2680 = vmax.f32 %v2574, 0.0
    %v2681 = vmax.f32 %v2579, 0.0
    %v2682 = vmax.f32 %v2582, 0.0
    %v2683 = vmax.f32 %v2587, 0.0
    %v2684 = vmax.f32 %v2590, 0.0
    %v2685 = vmax.f32 %v2595, 0.0
    %v2686 = vmax.f32 %v2598, 0.0
    %v2687 = vmax.f32 %v2603, 0.0
    %v2688 = vmax.f32 %v2606, 0.0
    %v2689 = vmax.f32 %v2611, 0.0
    %v2690 = vmax.f32 %v2614, 0.0
    %v2691 = vmax.f32 %v2619, 0.0
    %v2692 = vmax.f32 %v2622, 0.0
    %v2693 = vmax.f32 %v2627, 0.0
    %v2694 = vmax.f32 %v2630, 0.0
    %v2695 = vmax.f32 %v2635, 0.0
    %v2696 = vmax.f32 %v2638, 0.0
    %v2697 = vmax.f32 %v2643, 0.0
    %v2698 = vmax.f32 %v2646, 0.0
    %v2699 = vmax.f32 %v2651, 0.0
    %v2700 = vmax.f32 %v2654, 0.0
    %v2701 = vmax.f32 %v2659, 0.0
    %v2702 = vmax.f32 %v2662, 0.0
    %v2703 = vmax.f32 %v2667, 0.0
    %v2704 = vmax.f32 %v2670, 0.0
    %v2705 = vpack.c.bf16 %v2674, %v2673
    %v2706 = vpack.c.bf16 %v2676, %v2675
    %v2707 = vpack.c.bf16 %v2678, %v2677
    %v2708 = vpack.c.bf16 %v2680, %v2679
    %v2709 = vpack.c.bf16 %v2682, %v2681
    %v2710 = vpack.c.bf16 %v2684, %v2683
    %v2711 = vpack.c.bf16 %v2686, %v2685
    %v2712 = vpack.c.bf16 %v2688, %v2687
    %v2713 = vpack.c.bf16 %v2690, %v2689
    %v2714 = vpack.c.bf16 %v2692, %v2691
    %v2715 = vpack.c.bf16 %v2694, %v2693
    %v2716 = vpack.c.bf16 %v2696, %v2695
    %v2717 = vpack.c.bf16 %v2698, %v2697
    %v2718 = vpack.c.bf16 %v2700, %v2699
    %v2719 = vpack.c.bf16 %v2702, %v2701
    %v2720 = vpack.c.bf16 %v2704, %v2703
    %v2721 = vld [vmem:[%s5] sm:$0xf]
    %v2722 = vld [vmem:[%s5 + $0x4] sm:$0xf]
    %v2723 = vld [vmem:[%s5 + $0x8] sm:$0xf]
    %v2724 = vld [vmem:[%s5 + $0xc] sm:$0xf]
    %v2725 = vld [vmem:[%s5 + $0x10] sm:$0xf]
    %v2726 = vld [vmem:[%s5 + $0x14] sm:$0xf]
    %v2727 = vld [vmem:[%s5 + $0x18] sm:$0xf]
    %v2728 = vld [vmem:[%s5 + $0x1c] sm:$0xf]
    %v2729 = vld [vmem:[%s5 + $0x20] sm:$0xf]
    %v2730 = vld [vmem:[%s5 + $0x24] sm:$0xf]
    %v2731 = vld [vmem:[%s5 + $0x28] sm:$0xf]
    %v2732 = vld [vmem:[%s5 + $0x2c] sm:$0xf]
    %v2733 = vld [vmem:[%s5 + $0x30] sm:$0xf]
    %v2734 = vld [vmem:[%s5 + $0x34] sm:$0xf]
    %v2735 = vld [vmem:[%s5 + $0x38] sm:$0xf]
    %v2736 = vld [vmem:[%s5 + $0x3c] sm:$0xf]
    %v2737 = vld [vmem:[%s6] sm:$0x1]
    %v2739 = vlaneseq
    %v2740 = vshrl.u32 %v2739, 7
    %v2741 = vsub.s32 0, %v2740
    %v2742 = vrot.slane %v2737, %v2741
    %v2760 = vunpack.c.l.b16 %v2721
    %v2761 = vunpack.c.l.b16 %v2722
    %v2762 = vunpack.c.l.b16 %v2723
    %v2763 = vunpack.c.l.b16 %v2724
    %v2764 = vunpack.c.l.b16 %v2725
    %v2765 = vunpack.c.l.b16 %v2726
    %v2766 = vunpack.c.l.b16 %v2727
    %v2767 = vunpack.c.l.b16 %v2728
    %v2768 = vunpack.c.l.b16 %v2729
    %v2769 = vunpack.c.l.b16 %v2730
    %v2770 = vunpack.c.l.b16 %v2731
    %v2771 = vunpack.c.l.b16 %v2732
    %v2772 = vunpack.c.l.b16 %v2733
    %v2773 = vunpack.c.l.b16 %v2734
    %v2774 = vunpack.c.l.b16 %v2735
    %v2775 = vunpack.c.l.b16 %v2736
    %v2776 = vpack.c.b16 %v2761, %v2760
    %v2777 = vpack.c.b16 %v2763, %v2762
    %v2778 = vpack.c.b16 %v2765, %v2764
    %v2779 = vpack.c.b16 %v2767, %v2766
    %v2780 = vpack.c.b16 %v2769, %v2768
    %v2781 = vpack.c.b16 %v2771, %v2770
    %v2782 = vpack.c.b16 %v2773, %v2772
    %v2783 = vpack.c.b16 %v2775, %v2774
    %2792 = vmatprep.subr.bf16.mxu0 0
    %2793 = vmatpush1.bf16.msra.mxu0 %v2776
    %2794 = vmatprep.subr.bf16.mxu0 0
    %2795 = vmatpush1.bf16.msra.mxu0 %v2777
    %2796 = vmatprep.subr.bf16.mxu0 0
    %2797 = vmatpush1.bf16.msra.mxu0 %v2778
    %2798 = vmatprep.subr.bf16.mxu0 0
    %2799 = vmatpush1.bf16.msra.mxu0 %v2779
    %2800 = vmatprep.subr.bf16.mxu0 0
    %2801 = vmatpush1.bf16.msra.mxu0 %v2780
    %2802 = vmatprep.subr.bf16.mxu0 0
    %2803 = vmatpush1.bf16.msra.mxu0 %v2781
    %2804 = vmatprep.subr.bf16.mxu0 0
    %2805 = vmatpush1.bf16.msra.mxu0 %v2782
    %2806 = vmatprep.subr.bf16.mxu0 0
    %2807 = vmatpush1.bf16.msra.mxu0 %v2783
    %2808 = vmatprep.subr.bf16.mxu0 0
    %2809 = vmatpush1.bf16.msra.mxu0 0
    %2810 = vmatprep.subr.bf16.mxu0 0
    %2811 = vmatpush1.bf16.msra.mxu0 0
    %2812 = vmatprep.subr.bf16.mxu0 0
    %2813 = vmatpush1.bf16.msra.mxu0 0
    %2814 = vmatprep.subr.bf16.mxu0 0
    %2815 = vmatpush1.bf16.msra.mxu0 0
    %2816 = vmatprep.subr.bf16.mxu0 0
    %2817 = vmatpush1.bf16.msra.mxu0 0
    %2818 = vmatprep.subr.bf16.mxu0 0
    %2819 = vmatpush1.bf16.msra.mxu0 0
    %2820 = vmatprep.subr.bf16.mxu0 0
    %2821 = vmatpush1.bf16.msra.mxu0 0
    %2822 = vmatprep.subr.bf16.mxu0 0
    %2823 = vmatpush1.bf16.msra.mxu0 0
    %2824 = vmatprep.mubr.bf16.mxu0 0
    %2825 = vmatmul.mubr.bf16.gmra.mrb[0].mxu0 %v2705
    %v2826 = vpop.f32.mrb[0].mxu0
    %v2827 = vadd.f32 %v2742, %v2826
    %v2828 = vpop.f32.mrb[0].mxu0
    %v2829 = vpop.f32.mrb[0].mxu0
    %v2830 = vadd.f32 %v2742, %v2829
    %v2831 = vpop.f32.mrb[0].mxu0
    %2832 = vmatprep.mubr.bf16.mxu0 0
    %2833 = vmatmul.mubr.bf16.gmra.mrb[0].mxu0 %v2706
    %v2834 = vpop.f32.mrb[0].mxu0
    %v2835 = vadd.f32 %v2742, %v2834
    %v2836 = vpop.f32.mrb[0].mxu0
    %v2837 = vpop.f32.mrb[0].mxu0
    %v2838 = vadd.f32 %v2742, %v2837
    %v2839 = vpop.f32.mrb[0].mxu0
    %2840 = vmatprep.mubr.bf16.mxu0 0
    %2841 = vmatmul.mubr.bf16.gmra.mrb[0].mxu0 %v2707
    %v2842 = vpop.f32.mrb[0].mxu0
    %v2843 = vadd.f32 %v2742, %v2842
    %v2844 = vpop.f32.mrb[0].mxu0
    %v2845 = vpop.f32.mrb[0].mxu0
    %v2846 = vadd.f32 %v2742, %v2845
    %v2847 = vpop.f32.mrb[0].mxu0
    %2848 = vmatprep.mubr.bf16.mxu0 0
    %2849 = vmatmul.mubr.bf16.gmra.mrb[0].mxu0 %v2708
    %v2850 = vpop.f32.mrb[0].mxu0
    %v2851 = vadd.f32 %v2742, %v2850
    %v2852 = vpop.f32.mrb[0].mxu0
    %v2853 = vpop.f32.mrb[0].mxu0
    %v2854 = vadd.f32 %v2742, %v2853
    %v2855 = vpop.f32.mrb[0].mxu0
    %2856 = vmatprep.mubr.bf16.mxu0 0
    %2857 = vmatmul.mubr.bf16.gmra.mrb[0].mxu0 %v2709
    %v2858 = vpop.f32.mrb[0].mxu0
    %v2859 = vadd.f32 %v2742, %v2858
    %v2860 = vpop.f32.mrb[0].mxu0
    %v2861 = vpop.f32.mrb[0].mxu0
    %v2862 = vadd.f32 %v2742, %v2861
    %v2863 = vpop.f32.mrb[0].mxu0
    %2864 = vmatprep.mubr.bf16.mxu0 0
    %2865 = vmatmul.mubr.bf16.gmra.mrb[0].mxu0 %v2710
    %v2866 = vpop.f32.mrb[0].mxu0
    %v2867 = vadd.f32 %v2742, %v2866
    %v2868 = vpop.f32.mrb[0].mxu0
    %v2869 = vpop.f32.mrb[0].mxu0
    %v2870 = vadd.f32 %v2742, %v2869
    %v2871 = vpop.f32.mrb[0].mxu0
    %2872 = vmatprep.mubr.bf16.mxu0 0
    %2873 = vmatmul.mubr.bf16.gmra.mrb[0].mxu0 %v2711
    %v2874 = vpop.f32.mrb[0].mxu0
    %v2875 = vadd.f32 %v2742, %v2874
    %v2876 = vpop.f32.mrb[0].mxu0
    %v2877 = vpop.f32.mrb[0].mxu0
    %v2878 = vadd.f32 %v2742, %v2877
    %v2879 = vpop.f32.mrb[0].mxu0
    %2880 = vmatprep.mubr.bf16.mxu0 0
    %2881 = vmatmul.mubr.bf16.gmra.mrb[0].mxu0 %v2712
    %v2882 = vpop.f32.mrb[0].mxu0
    %v2883 = vadd.f32 %v2742, %v2882
    %v2884 = vpop.f32.mrb[0].mxu0
    %v2885 = vpop.f32.mrb[0].mxu0
    %v2886 = vadd.f32 %v2742, %v2885
    %v2887 = vpop.f32.mrb[0].mxu0
    %2888 = vmatprep.mubr.bf16.mxu0 0
    %2889 = vmatmul.mubr.bf16.gmra.mrb[0].mxu0 %v2713
    %v2890 = vpop.f32.mrb[0].mxu0
    %v2891 = vadd.f32 %v2742, %v2890
    %v2892 = vpop.f32.mrb[0].mxu0
    %v2893 = vpop.f32.mrb[0].mxu0
    %v2894 = vadd.f32 %v2742, %v2893
    %v2895 = vpop.f32.mrb[0].mxu0
    %2896 = vmatprep.mubr.bf16.mxu0 0
    %2897 = vmatmul.mubr.bf16.gmra.mrb[0].mxu0 %v2714
    %v2898 = vpop.f32.mrb[0].mxu0
    %v2899 = vadd.f32 %v2742, %v2898
    %v2900 = vpop.f32.mrb[0].mxu0
    %v2901 = vpop.f32.mrb[0].mxu0
    %v2902 = vadd.f32 %v2742, %v2901
    %v2903 = vpop.f32.mrb[0].mxu0
    %2904 = vmatprep.mubr.bf16.mxu0 0
    %2905 = vmatmul.mubr.bf16.gmra.mrb[0].mxu0 %v2715
    %v2906 = vpop.f32.mrb[0].mxu0
    %v2907 = vadd.f32 %v2742, %v2906
    %v2908 = vpop.f32.mrb[0].mxu0
    %v2909 = vpop.f32.mrb[0].mxu0
    %v2910 = vadd.f32 %v2742, %v2909
    %v2911 = vpop.f32.mrb[0].mxu0
    %2912 = vmatprep.mubr.bf16.mxu0 0
    %2913 = vmatmul.mubr.bf16.gmra.mrb[0].mxu0 %v2716
    %v2914 = vpop.f32.mrb[0].mxu0
    %v2915 = vadd.f32 %v2742, %v2914
    %v2916 = vpop.f32.mrb[0].mxu0
    %v2917 = vpop.f32.mrb[0].mxu0
    %v2918 = vadd.f32 %v2742, %v2917
    %v2919 = vpop.f32.mrb[0].mxu0
    %2920 = vmatprep.mubr.bf16.mxu0 0
    %2921 = vmatmul.mubr.bf16.gmra.mrb[0].mxu0 %v2717
    %v2922 = vpop.f32.mrb[0].mxu0
    %v2923 = vadd.f32 %v2742, %v2922
    %v2924 = vpop.f32.mrb[0].mxu0
    %v2925 = vpop.f32.mrb[0].mxu0
    %v2926 = vadd.f32 %v2742, %v2925
    %v2927 = vpop.f32.mrb[0].mxu0
    %2928 = vmatprep.mubr.bf16.mxu0 0
    %2929 = vmatmul.mubr.bf16.gmra.mrb[0].mxu0 %v2718
    %v2930 = vpop.f32.mrb[0].mxu0
    %v2931 = vadd.f32 %v2742, %v2930
    %v2932 = vpop.f32.mrb[0].mxu0
    %v2933 = vpop.f32.mrb[0].mxu0
    %v2934 = vadd.f32 %v2742, %v2933
    %v2935 = vpop.f32.mrb[0].mxu0
    %2936 = vmatprep.mubr.bf16.mxu0 0
    %2937 = vmatmul.mubr.bf16.gmra.mrb[0].mxu0 %v2719
    %v2938 = vpop.f32.mrb[0].mxu0
    %v2939 = vadd.f32 %v2742, %v2938
    %v2940 = vpop.f32.mrb[0].mxu0
    %v2941 = vpop.f32.mrb[0].mxu0
    %v2942 = vadd.f32 %v2742, %v2941
    %v2943 = vpop.f32.mrb[0].mxu0
    %2944 = vmatprep.mubr.bf16.mxu0 0
    %2945 = vmatmul.mubr.bf16.gmra.mrb[0].mxu0 %v2720
    %v2946 = vpop.f32.mrb[0].mxu0
    %v2947 = vadd.f32 %v2742, %v2946
    %v2948 = vpop.f32.mrb[0].mxu0
    %v2949 = vpop.f32.mrb[0].mxu0
    %v2950 = vadd.f32 %v2742, %v2949
    %v2951 = vpop.f32.mrb[0].mxu0
    %2952 = vdwg.mxu0
    %vm2953 = vcmask 23552
    %2954 = vst.msk [vmem:[%s7] sm:$0xff] %vm2953, %v2827
    %2955 = vst.msk [vmem:[%s7 + $0x8] sm:$0xff] %vm2953, %v2830
    %2956 = vst.msk [vmem:[%s7 + $0x10] sm:$0xff] %vm2953, %v2835
    %2957 = vst.msk [vmem:[%s7 + $0x18] sm:$0xff] %vm2953, %v2838
    %2958 = vst.msk [vmem:[%s7 + $0x20] sm:$0xff] %vm2953, %v2843
    %2959 = vst.msk [vmem:[%s7 + $0x28] sm:$0xff] %vm2953, %v2846
    %2960 = vst.msk [vmem:[%s7 + $0x30] sm:$0xff] %vm2953, %v2851
    %2961 = vst.msk [vmem:[%s7 + $0x38] sm:$0xff] %vm2953, %v2854
    %2962 = vst.msk [vmem:[%s7 + $0x40] sm:$0xff] %vm2953, %v2859
    %2963 = vst.msk [vmem:[%s7 + $0x48] sm:$0xff] %vm2953, %v2862
    %2964 = vst.msk [vmem:[%s7 + $0x50] sm:$0xff] %vm2953, %v2867
    %2965 = vst.msk [vmem:[%s7 + $0x58] sm:$0xff] %vm2953, %v2870
    %2966 = vst.msk [vmem:[%s7 + $0x60] sm:$0xff] %vm2953, %v2875
    %2967 = vst.msk [vmem:[%s7 + $0x68] sm:$0xff] %vm2953, %v2878
    %2968 = vst.msk [vmem:[%s7 + $0x70] sm:$0xff] %vm2953, %v2883
    %2969 = vst.msk [vmem:[%s7 + $0x78] sm:$0xff] %vm2953, %v2886
    %2970 = vst.msk [vmem:[%s7 + $0x80] sm:$0xff] %vm2953, %v2891
    %2971 = vst.msk [vmem:[%s7 + $0x88] sm:$0xff] %vm2953, %v2894
    %2972 = vst.msk [vmem:[%s7 + $0x90] sm:$0xff] %vm2953, %v2899
    %2973 = vst.msk [vmem:[%s7 + $0x98] sm:$0xff] %vm2953, %v2902
    %2974 = vst.msk [vmem:[%s7 + $0xa0] sm:$0xff] %vm2953, %v2907
    %2975 = vst.msk [vmem:[%s7 + $0xa8] sm:$0xff] %vm2953, %v2910
    %2976 = vst.msk [vmem:[%s7 + $0xb0] sm:$0xff] %vm2953, %v2915
    %2977 = vst.msk [vmem:[%s7 + $0xb8] sm:$0xff] %vm2953, %v2918
    %2978 = vst.msk [vmem:[%s7 + $0xc0] sm:$0xff] %vm2953, %v2923
    %2979 = vst.msk [vmem:[%s7 + $0xc8] sm:$0xff] %vm2953, %v2926
    %2980 = vst.msk [vmem:[%s7 + $0xd0] sm:$0xff] %vm2953, %v2931
    %2981 = vst.msk [vmem:[%s7 + $0xd8] sm:$0xff] %vm2953, %v2934
    %2982 = vst.msk [vmem:[%s7 + $0xe0] sm:$0xff] %vm2953, %v2939
    %2983 = vst.msk [vmem:[%s7 + $0xe8] sm:$0xff] %vm2953, %v2942
    %2984 = vst.msk [vmem:[%s7 + $0xf0] sm:$0xff] %vm2953, %v2947
    %2985 = vst.msk [vmem:[%s7 + $0xf8] sm:$0xff] %vm2953, %v2950
    // Predicated region
    $region34: #{tpu_custom_call.1} parent=1 // pred_check
      _
    $region35: #{tpu_custom_call.1} parent=1 // pred_check_branch
      %2987 = sbr.rel (0) target = $region37
    $region36: #{tpu_custom_call.1} parent=1 // pred_region
      _
    $region37: #{tpu_custom_call.1} parent=1 // pred_fallthru
      _
    // Predicated region
    $region38: #{tpu_custom_call.1} parent=1 // pred_check
      _
    $region39: #{tpu_custom_call.1} parent=1 // pred_check_branch
      %2989 = sbr.rel (0) target = $region41
    $region40: #{tpu_custom_call.1} parent=1 // pred_region
      _
    $region41: #{tpu_custom_call.1} parent=1 // pred_fallthru
      _
    %2990 = vsyncpa [#allocation3], 1

</llo_original>
